<compile_context>
chip_gen: v7x
topology: tpu7x:2x2x1
jax: 0.10.0
libtpu: 0.0.40
codegen_flags: <defaults>
</compile_context>

<pallas_src>
from functools import partial
from math import sqrt

import jax
import jax.numpy as jnp
from jax.experimental import pallas as pl
from jax.experimental.pallas import tpu as pltpu

_NTAB = 128     # embedding rows padded 95 -> 128 (one-hot width per half)
_PACK_W = 16    # packed per-edge stream width: 6 rbf | 1.0 | x[i] | x[j]+128 | pad
_CHUNK = 256    # in-kernel sub-tile rows (bounds live temporaries / spills)


def _silu_f32(x):
    # SiLU in f32; sigmoid = 1 / (1 + exp(-x)) via EUP exp + approx reciprocal.
    return x * pl.reciprocal(1.0 + jnp.exp(-x), approx=True)


def _embedding_block_kernel(packed_ref, tw_ref, w3_ref, wrbf_ref, out_ref):
    te = out_ref.shape[0]
    cdt = tw_ref.dtype                      # bf16 MXU operand dtype

    # Hoisted lane iota for the two-hot gather (built once per grid step).
    lanes = jax.lax.broadcasted_iota(jnp.int32, (_CHUNK, 2 * _NTAB), 1)

    def body(c, carry):
        r0 = pl.multiple_of(c * _CHUNK, _CHUNK)
        p = packed_ref[pl.ds(r0, _CHUNK), :]                      # (C,16) bf16

        # rbf path: silu(rbf @ W_rbf + b_rbf); b_rbf folded via the 1.0
        # column, index columns multiply zero rows of wrbf.
        rbf_act = _silu_f32(jnp.dot(p, wrbf_ref[...],
                                    preferred_element_type=jnp.float32))
        acc = jnp.dot(rbf_act.astype(cdt), w3_ref[...],
                      preferred_element_type=jnp.float32)         # (C,H) f32

        # Embedding gather + first two concat-Linear blocks as ONE K=256
        # matmul: two_hot(x[i], 128 + x[j]) @ [table@W1 + b_lin ; table@W2].
        zi = p[:, 7:8].astype(jnp.int32)                          # in [0,128)
        zj = p[:, 8:9].astype(jnp.int32)                          # in [128,256)
        two_hot = ((lanes == zi) | (lanes == zj)).astype(cdt)     # (C,256)
        acc += jnp.dot(two_hot, tw_ref[...],
                       preferred_element_type=jnp.float32)

        out_ref[pl.ds(r0, _CHUNK), :] = _silu_f32(acc).astype(out_ref.dtype)
        return carry

    jax.lax.fori_loop(0, te // _CHUNK, body, 0, unroll=False)


def embedding_block_forward(params, x, rbf, i, j, *, tile_e=1024,
                            compute_dtype=jnp.bfloat16,
                            out_dtype=jnp.float32):
    """Fused EmbeddingBlock forward.

    params (JAX [in, out] weight layout):
      emb   : (95, H) f32   w_rbf : (6, H) f32   b_rbf : (H,) f32
      w_lin : (3H, H) f32   b_lin : (H,) f32
    x: (N,) int atom types, rbf: (E, 6) f32, i/j: (E,) int edge endpoints.
    Returns (E, H) out_dtype.
    """
    # TODO(synk): the module's `act` is an arbitrary callable; SiLU (DimeNet
    # default) is hard-wired in the kernel.
    assert tile_e % _CHUNK == 0, "tile_e must be a multiple of the sub-chunk"
    emb, w_rbf, b_rbf = params["emb"], params["w_rbf"], params["b_rbf"]
    w_lin, b_lin = params["w_lin"], params["b_lin"]
    H = emb.shape[1]
    E = rbf.shape[0]

    # Atom types at each edge endpoint -- these index the embedding table.
    zi = x[i].astype(jnp.float32)                       # values in [0, 95)
    zj = x[j].astype(jnp.float32) + float(_NTAB)        # shifted to [128, 223)

    # Fold the padded table into the first two concat-Linear blocks and fold
    # b_lin into the first half (each two-hot row hits each half exactly once).
    table = jnp.zeros((_NTAB, H), jnp.float32).at[: emb.shape[0]].set(emb)
    w1, w2, w3 = w_lin[:H], w_lin[H:2 * H], w_lin[2 * H:]
    tw = jnp.concatenate([table @ w1 + b_lin[None, :], table @ w2],
                         axis=0).astype(compute_dtype)            # (256, H)
    w3c = w3.astype(compute_dtype)                                # (H, H)

    # rbf weight padded to K=_PACK_W with b_rbf folded at the 1.0 column;
    # rows 7.. stay zero so the packed index columns contribute nothing.
    wrbf = jnp.zeros((_PACK_W, H), jnp.float32)
    wrbf = wrbf.at[:6].set(w_rbf).at[6].set(b_rbf).astype(compute_dtype)

    # Pack ALL streamed per-edge data into one lane-dense bf16 array.
    packed = jnp.zeros((E, _PACK_W), jnp.float32)
    packed = packed.at[:, :6].set(rbf.astype(jnp.float32))
    packed = packed.at[:, 6].set(1.0)
    packed = packed.at[:, 7].set(zi)
    packed = packed.at[:, 8].set(zj)
    packed = packed.astype(compute_dtype)               # ints < 256 are exact

    # Pad the edge count to a multiple of the tile.
    e_pad = -(-E // tile_e) * tile_e
    pad = e_pad - E
    if pad:
        packed = jnp.pad(packed, ((0, pad), (0, 0)))

    stream = lambda e: (e, 0)   # streamed per-tile blocks
    keep = lambda e: (0, 0)     # VMEM-resident across the whole grid

    out = pl.pallas_call(
        _embedding_block_kernel,
        out_shape=jax.ShapeDtypeStruct((e_pad, H), out_dtype),
        grid_spec=pltpu.PrefetchScalarGridSpec(
            num_scalar_prefetch=0,
            grid=(e_pad // tile_e,),
            in_specs=[
                pl.BlockSpec((tile_e, _PACK_W), stream),   # packed rbf/1/zi/zj
                pl.BlockSpec((2 * _NTAB, H), keep),        # [tblW1+b ; tblW2]
                pl.BlockSpec((H, H), keep),                # W3
                pl.BlockSpec((_PACK_W, H), keep),          # W_rbf (+ b_rbf row)
            ],
            out_specs=pl.BlockSpec((tile_e, H), stream),
        ),
        compiler_params=pltpu.CompilerParams(
            dimension_semantics=("parallel",),
        ),
    )(packed, tw, w3c, wrbf)

    return out[:E]


def embedding_block_reference(params, x, rbf, i, j):
    """Pure-JAX f32 reference matching the PyTorch module (act = SiLU)."""
    x_emb = params["emb"][x]                                # (N, H)
    rbf_act = jax.nn.silu(rbf @ params["w_rbf"] + params["b_rbf"])
    h = jnp.concatenate([x_emb[i], x_emb[j], rbf_act], axis=-1)
    return jax.nn.silu(h @ params["w_lin"] + params["b_lin"])


if __name__ == "__main__":
    H = 128       # DimeNet default hidden_channels (lane-dense output)
    N = 64        # atoms
    E = 4096      # edges -> 4 grid steps with tile_e=1024 (>=2 for v7x split)

    key = jax.random.PRNGKey(0)
    k = jax.random.split(key, 9)
    x = jax.random.randint(k[0], (N,), 0, 95, dtype=jnp.int32)
    rbf = jax.random.uniform(k[1], (E, 6), jnp.float32, -1.0, 1.0)
    i = jax.random.randint(k[2], (E,), 0, N, dtype=jnp.int32)
    j = jax.random.randint(k[3], (E,), 0, N, dtype=jnp.int32)

    # Parameter init mimicking the PyTorch reset_parameters().
    b_rbf_bound = 1.0 / sqrt(6.0)
    b_lin_bound = 1.0 / sqrt(3.0 * H)
    params = {
        "emb": jax.random.uniform(k[4], (95, H), jnp.float32,
                                  -sqrt(3.0), sqrt(3.0)),
        "w_rbf": jax.random.uniform(k[5], (6, H), jnp.float32,
                                    -b_rbf_bound, b_rbf_bound),
        "b_rbf": jax.random.uniform(k[6], (H,), jnp.float32,
                                    -b_rbf_bound, b_rbf_bound),
        "w_lin": jax.random.uniform(k[7], (3 * H, H), jnp.float32,
                                    -b_lin_bound, b_lin_bound),
        "b_lin": jax.random.uniform(k[8], (H,), jnp.float32,
                                    -b_lin_bound, b_lin_bound),
    }

    fwd = jax.jit(partial(embedding_block_forward, tile_e=1024))
    out = jax.block_until_ready(fwd(params, x, rbf, i, j))

    ref = embedding_block_reference(params, x, rbf, i, j)
    assert out.shape == (E, H), out.shape
    if not jnp.allclose(out, ref, rtol=3e-2, atol=3e-2):
        max_err = float(jnp.max(jnp.abs(out - ref)))
        raise AssertionError(f"mismatch vs reference, max abs err = {max_err}")

    print("KERNEL_OK")
</pallas_src>

<mosaic_0001>
module attributes {stable_mosaic.version = 11 : i64} {
  func.func @_embedding_block_kernel(%arg0: i32, %arg1: memref<1024x16xbf16, #tpu.memory_space<vmem>>, %arg2: memref<256x128xbf16, #tpu.memory_space<vmem>>, %arg3: memref<128x128xbf16, #tpu.memory_space<vmem>>, %arg4: memref<16x128xbf16, #tpu.memory_space<vmem>>, %arg5: memref<1024x128xf32, #tpu.memory_space<vmem>>) attributes {dimension_semantics = [#tpu.dimension_semantics<parallel>], iteration_bounds = array<i64: 4>, scalar_prefetch = 0 : i64, scratch_operands = 0 : i64, tpu.core_type = #tpu.core_type<tc>, window_params = [{transform_indices = @transform_0, window_bounds = array<i64: 1024, 16>}, {pipeline_mode = #tpu.pipeline_mode<synchronous>, transform_indices = @transform_1, window_bounds = array<i64: 256, 128>}, {pipeline_mode = #tpu.pipeline_mode<synchronous>, transform_indices = @transform_2, window_bounds = array<i64: 128, 128>}, {pipeline_mode = #tpu.pipeline_mode<synchronous>, transform_indices = @transform_3, window_bounds = array<i64: 16, 128>}, {transform_indices = @transform_4, window_bounds = array<i64: 1024, 128>}]} {
    %0 = tpu.iota {dimensions = array<i32: 1>} : vector<256x256xi32>
    %c0_i32 = arith.constant 0 : i32
    %c4_i32 = arith.constant 4 : i32
    %1 = arith.addi %c0_i32, %c4_i32 : i32
    %c1_i32 = arith.constant 1 : i32
    scf.for %arg6 = %c0_i32 to %1 step %c1_i32  : i32 {
      %c256_i32 = arith.constant 256 : i32
      %2 = arith.muli %arg6, %c256_i32 : i32
      %3 = tpu.assume_multiple %2, 256 : i32
      %4 = arith.index_cast %3 : i32 to index
      %c0 = arith.constant 0 : index
      %5 = vector.load %arg1[%4, %c0] : memref<1024x16xbf16, #tpu.memory_space<vmem>>, vector<256x16xbf16>
      %c0_1 = arith.constant 0 : index
      %c0_2 = arith.constant 0 : index
      %6 = vector.load %arg4[%c0_1, %c0_2] : memref<16x128xbf16, #tpu.memory_space<vmem>>, vector<16x128xbf16>
      %cst = arith.constant dense<0.000000e+00> : vector<256x128xf32>
      %7 = tpu.matmul %5, %6, %cst {dimension_numbers = #tpu.dot_dimension_numbers<[1], [0], [0], [1], [0, 0, 1, 1], [], []>} : vector<256x16xbf16>, vector<16x128xbf16>, vector<256x128xf32> -> vector<256x128xf32>
      %cst_3 = arith.constant 0.000000e+00 : f32
      %8 = vector.broadcast %cst_3 : f32 to vector<256x128xf32>
      %9 = arith.subf %8, %7 : vector<256x128xf32>
      %10 = math.exp %9 : vector<256x128xf32>
      %cst_4 = arith.constant 1.000000e+00 : f32
      %11 = vector.broadcast %cst_4 : f32 to vector<256x128xf32>
      %12 = arith.addf %11, %10 : vector<256x128xf32>
      %13 = tpu.reciprocal %12 {approx = true} : vector<256x128xf32> -> vector<256x128xf32>
      %14 = arith.mulf %7, %13 : vector<256x128xf32>
      %15 = arith.truncf %14 : vector<256x128xf32> to vector<256x128xbf16>
      %c0_5 = arith.constant 0 : index
      %c0_6 = arith.constant 0 : index
      %16 = vector.load %arg3[%c0_5, %c0_6] : memref<128x128xbf16, #tpu.memory_space<vmem>>, vector<128x128xbf16>
      %cst_7 = arith.constant dense<0.000000e+00> : vector<256x128xf32>
      %17 = tpu.matmul %15, %16, %cst_7 {dimension_numbers = #tpu.dot_dimension_numbers<[1], [0], [0], [1], [0, 0, 1, 1], [], []>} : vector<256x128xbf16>, vector<128x128xbf16>, vector<256x128xf32> -> vector<256x128xf32>
      %18 = vector.extract_strided_slice %5 {offsets = [0, 7], sizes = [256, 1], strides = [1, 1]} : vector<256x16xbf16> to vector<256x1xbf16>
      %19 = arith.fptosi %18 : vector<256x1xbf16> to vector<256x1xi32>
      %20 = vector.extract_strided_slice %5 {offsets = [0, 8], sizes = [256, 1], strides = [1, 1]} : vector<256x16xbf16> to vector<256x1xbf16>
      %21 = arith.fptosi %20 : vector<256x1xbf16> to vector<256x1xi32>
      %22 = vector.broadcast %19 : vector<256x1xi32> to vector<256x256xi32>
      %23 = arith.cmpi eq, %0, %22 : vector<256x256xi32>
      %24 = vector.broadcast %21 : vector<256x1xi32> to vector<256x256xi32>
      %25 = arith.cmpi eq, %0, %24 : vector<256x256xi32>
      %26 = arith.ori %23, %25 : vector<256x256xi1>
      %27 = arith.extui %26 : vector<256x256xi1> to vector<256x256xi32>
      %28 = arith.sitofp %27 : vector<256x256xi32> to vector<256x256xf32>
      %29 = arith.truncf %28 : vector<256x256xf32> to vector<256x256xbf16>
      %c0_8 = arith.constant 0 : index
      %c0_9 = arith.constant 0 : index
      %30 = vector.load %arg2[%c0_8, %c0_9] : memref<256x128xbf16, #tpu.memory_space<vmem>>, vector<256x128xbf16>
      %cst_10 = arith.constant dense<0.000000e+00> : vector<256x128xf32>
      %31 = tpu.matmul %29, %30, %cst_10 {dimension_numbers = #tpu.dot_dimension_numbers<[1], [0], [0], [1], [0, 0, 1, 1], [], []>} : vector<256x256xbf16>, vector<256x128xbf16>, vector<256x128xf32> -> vector<256x128xf32>
      %32 = arith.addf %17, %31 : vector<256x128xf32>
      %cst_11 = arith.constant 0.000000e+00 : f32
      %33 = vector.broadcast %cst_11 : f32 to vector<256x128xf32>
      %34 = arith.subf %33, %32 : vector<256x128xf32>
      %35 = math.exp %34 : vector<256x128xf32>
      %cst_12 = arith.constant 1.000000e+00 : f32
      %36 = vector.broadcast %cst_12 : f32 to vector<256x128xf32>
      %37 = arith.addf %36, %35 : vector<256x128xf32>
      %38 = tpu.reciprocal %37 {approx = true} : vector<256x128xf32> -> vector<256x128xf32>
      %39 = arith.mulf %32, %38 : vector<256x128xf32>
      %40 = arith.index_cast %3 : i32 to index
      %c0_13 = arith.constant 0 : index
      %41 = vector.load %arg5[%40, %c0_13] : memref<1024x128xf32, #tpu.memory_space<vmem>>, vector<256x128xf32>
      tpu.vector_store %arg5[%40, %c0_13], %39 {strides = array<i32>} : memref<1024x128xf32, #tpu.memory_space<vmem>>, vector<256x128xf32>,
    }
    %c4_i32_0 = arith.constant 4 : i32
    return
  }
  func.func @transform_0(%arg0: i32) -> (i32, i32) {
    %c0_i32 = arith.constant 0 : i32
    %c0_i32_0 = arith.constant 0 : i32
    return %arg0, %c0_i32 : i32, i32
  }
  func.func @transform_1(%arg0: i32) -> (i32, i32) {
    %c0_i32 = arith.constant 0 : i32
    %c0_i32_0 = arith.constant 0 : i32
    %c0_i32_1 = arith.constant 0 : i32
    return %c0_i32, %c0_i32_0 : i32, i32
  }
  func.func @transform_2(%arg0: i32) -> (i32, i32) {
    %c0_i32 = arith.constant 0 : i32
    %c0_i32_0 = arith.constant 0 : i32
    %c0_i32_1 = arith.constant 0 : i32
    return %c0_i32, %c0_i32_0 : i32, i32
  }
  func.func @transform_3(%arg0: i32) -> (i32, i32) {
    %c0_i32 = arith.constant 0 : i32
    %c0_i32_0 = arith.constant 0 : i32
    %c0_i32_1 = arith.constant 0 : i32
    return %c0_i32, %c0_i32_0 : i32, i32
  }
  func.func @transform_4(%arg0: i32) -> (i32, i32) {
    %c0_i32 = arith.constant 0 : i32
    %c0_i32_0 = arith.constant 0 : i32
    return %arg0, %c0_i32 : i32, i32
  }
}

</mosaic_0001>

<llo_original>
// kernel: embedding_block_forward.1
$region0: #{embedding_block_forward.1}
  #allocation0 [shape = 'u32[]', space=smem, size = 0x4, offset = 0x4, fixed_abs, tag = 'smem constant byte address 0x4 - core index']
  #allocation1 [shape = 'u32[144,128]{1,0:T(1,128)}', space=vmem, size = 0x12000, scoped, tag = 'internal scratch']
  %s0 = inlined_call_operand.vmem [shape: bf16[4096,16], index: 0, kind: input, shape index: {}]
  %s1 = inlined_call_operand.vmem [shape: bf16[256,128], index: 1, kind: input, shape index: {}]
  %s2 = inlined_call_operand.vmem [shape: bf16[128,128], index: 2, kind: input, shape index: {}]
  %s3 = inlined_call_operand.vmem [shape: bf16[16,128], index: 3, kind: input, shape index: {}]
  %s4 = inlined_call_operand.hbm [shape: f32[4096,128], index: 4, kind: output, shape index: {}]
  %s5 = sld [smem:[#allocation0]]
  $region56: #{embedding_block_forward.1} parent=0
    _
  %s7 = ssub.s32 1, %s5
  %s8 = scalar_select 0, %s7, %s5
  $region1: #{embedding_block_forward.1} parent=0
    #allocation2 [shape = 'u8[1048576]{0}', space=vmem, size = 0x100000, scoped, tag = 'output window, operand 0']
    #allocation3 [shape = 's32[2]{0}', space=sflag, size = 0x8, scoped, tag = 'scoped memory for embedding_block_forward.1']
    %9 = vsyncpa [#allocation3], 0
    %s10 = scalar_lea.sflag [#allocation3], 1
    %11 = vsyncpa %s10, 0
    loop: start=0, step=1, limit=6
    $region2: #{embedding_block_forward.1} parent=1 // loop_pre_header
      _
    $region3: #{embedding_block_forward.1} parent=1 // loop_header
      %s13 = sphi 0, %s17
      %p14 = scmp.ge.s32.totalorder %s13, 6
      %s23 = sphi 0, %s25
      %s26 = sphi 0, %s23
      %s27 = sphi 0, %s26
      %s43 = sphi 0, %s27
      %s47 = sphi 0, %s47
      %s49 = sphi 0, %s47
      %s50 = sphi 0, %s49
      %s64 = sphi 0, %s50
      %s68 = sphi 0, %s68
      %s70 = sphi 0, %s68
      %s71 = sphi 0, %s70
      %s85 = sphi 0, %s71
      %s89 = sphi 0, %s89
      %s91 = sphi 0, %s89
      %s92 = sphi 0, %s91
      %s106 = sphi 0, %s92
      %s112 = sphi 0, %s114
      %s115 = sphi 0, %s112
      %s116 = sphi 0, %s115
      %s132 = sphi 0, %s116
    $region4: #{embedding_block_forward.1} parent=1 // loop_header_branch
      %16 = sbr.rel (%p14) target = $region8
    $region5: #{embedding_block_forward.1} parent=1 // loop_body
      %s18 = ssub.s32 %s13, 1
      %s19 = ssub.s32 %s13, 2
      %s20 = sadd.s32 %s13, 1
      %s21 = ssub.s32 %s13, %s20
      %p22 = scmp.eq.s32.totalorder %s21, 0
      %s24 = sadd.s32 %s23, 1
      %s25 = scalar_select %p22, %s23, %s24
      %p28 = pneg %p22
      %p29 = scmp.eq.s32.totalorder %s13, 3
      %p30 = por %p28, %p29
      %p31 = scmp.ne.s32.totalorder %s23, %s26
      %p32 = scmp.eq.s32.totalorder %s13, 0
      %p33 = por %p31, %p32
      %p34 = scmp.ne.s32.totalorder %s23, %s26
      %p35 = scmp.eq.s32.totalorder %s18, 3
      %p36 = por %p34, %p35
      %p37 = scmp.ne.s32.totalorder %s26, %s27
      %p38 = scmp.eq.s32.totalorder %s18, 0
      %p39 = por %p37, %p38
      %p40 = scmp.ne.s32.totalorder %s26, %s27
      %p41 = scmp.eq.s32.totalorder %s19, 3
      %p42 = por %p40, %p41
      %p44 = scmp.ne.s32.totalorder %s27, %s43
      %p45 = scmp.eq.s32.totalorder %s19, 0
      %p46 = por %p44, %p45
      %s48 = sadd.s32 %s47, 1
      %p51 = scmp.eq.s32.totalorder %s13, 3
      %p52 = scmp.ne.s32.totalorder %s47, %s49
      %p53 = scmp.eq.s32.totalorder %s13, 0
      %p54 = por %p52, %p53
      %p55 = scmp.ne.s32.totalorder %s47, %s49
      %p56 = scmp.eq.s32.totalorder %s18, 3
      %p57 = por %p55, %p56
      %p58 = scmp.ne.s32.totalorder %s49, %s50
      %p59 = scmp.eq.s32.totalorder %s18, 0
      %p60 = por %p58, %p59
      %p61 = scmp.ne.s32.totalorder %s49, %s50
      %p62 = scmp.eq.s32.totalorder %s19, 3
      %p63 = por %p61, %p62
      %p65 = scmp.ne.s32.totalorder %s50, %s64
      %p66 = scmp.eq.s32.totalorder %s19, 0
      %p67 = por %p65, %p66
      %s69 = sadd.s32 %s68, 1
      %p72 = scmp.eq.s32.totalorder %s13, 3
      %p73 = scmp.ne.s32.totalorder %s68, %s70
      %p74 = scmp.eq.s32.totalorder %s13, 0
      %p75 = por %p73, %p74
      %p76 = scmp.ne.s32.totalorder %s68, %s70
      %p77 = scmp.eq.s32.totalorder %s18, 3
      %p78 = por %p76, %p77
      %p79 = scmp.ne.s32.totalorder %s70, %s71
      %p80 = scmp.eq.s32.totalorder %s18, 0
      %p81 = por %p79, %p80
      %p82 = scmp.ne.s32.totalorder %s70, %s71
      %p83 = scmp.eq.s32.totalorder %s19, 3
      %p84 = por %p82, %p83
      %p86 = scmp.ne.s32.totalorder %s71, %s85
      %p87 = scmp.eq.s32.totalorder %s19, 0
      %p88 = por %p86, %p87
      %s90 = sadd.s32 %s89, 1
      %p93 = scmp.eq.s32.totalorder %s13, 3
      %p94 = scmp.ne.s32.totalorder %s89, %s91
      %p95 = scmp.eq.s32.totalorder %s13, 0
      %p96 = por %p94, %p95
      %p97 = scmp.ne.s32.totalorder %s89, %s91
      %p98 = scmp.eq.s32.totalorder %s18, 3
      %p99 = por %p97, %p98
      %p100 = scmp.ne.s32.totalorder %s91, %s92
      %p101 = scmp.eq.s32.totalorder %s18, 0
      %p102 = por %p100, %p101
      %p103 = scmp.ne.s32.totalorder %s91, %s92
      %p104 = scmp.eq.s32.totalorder %s19, 3
      %p105 = por %p103, %p104
      %p107 = scmp.ne.s32.totalorder %s92, %s106
      %p108 = scmp.eq.s32.totalorder %s19, 0
      %p109 = por %p107, %p108
      %s110 = ssub.s32 %s13, %s20
      %p111 = scmp.eq.s32.totalorder %s110, 0
      %s113 = sadd.s32 %s112, 1
      %s114 = scalar_select %p111, %s112, %s113
      %p117 = pneg %p111
      %p118 = scmp.eq.s32.totalorder %s13, 3
      %p119 = por %p117, %p118
      %p120 = scmp.ne.s32.totalorder %s112, %s115
      %p121 = scmp.eq.s32.totalorder %s13, 0
      %p122 = por %p120, %p121
      %p123 = scmp.ne.s32.totalorder %s112, %s115
      %p124 = scmp.eq.s32.totalorder %s18, 3
      %p125 = por %p123, %p124
      %p126 = scmp.ne.s32.totalorder %s115, %s116
      %p127 = scmp.eq.s32.totalorder %s18, 0
      %p128 = por %p126, %p127
      %p129 = scmp.ne.s32.totalorder %s115, %s116
      %p130 = scmp.eq.s32.totalorder %s19, 3
      %p131 = por %p129, %p130
      %p133 = scmp.ne.s32.totalorder %s116, %s132
      %p134 = scmp.eq.s32.totalorder %s19, 0
      %p135 = por %p133, %p134
      %p136 = scmp.le.s32.totalorder 1, %s13
      %p137 = scmp.lt.s32.totalorder %s13, 5
      %p138 = pnand %p136, %p137
      %p139 = pneg %p138
      // Predicated region
      $region9: #{embedding_block_forward.1} parent=5 // pred_check
        _
      $region10: #{embedding_block_forward.1} parent=5 // pred_check_branch
        %141 = sbr.rel (%p138) target = $region12
      $region11: #{embedding_block_forward.1} parent=5 // pred_region
        %s142 = ssub.s32 %s13, 1
        // Predicated region
        $region13: #{embedding_block_forward.1} parent=11 // pred_check
          %p143 = pneg %p60
        $region14: #{embedding_block_forward.1} parent=11 // pred_check_branch
          %145 = sbr.rel (%p143) target = $region16
        $region15: #{embedding_block_forward.1} parent=11 // pred_region
          _
        $region16: #{embedding_block_forward.1} parent=11 // pred_fallthru
          _
        // Predicated region
        $region17: #{embedding_block_forward.1} parent=11 // pred_check
          %p146 = pneg %p81
        $region18: #{embedding_block_forward.1} parent=11 // pred_check_branch
          %148 = sbr.rel (%p146) target = $region20
        $region19: #{embedding_block_forward.1} parent=11 // pred_region
          _
        $region20: #{embedding_block_forward.1} parent=11 // pred_fallthru
          _
        // Predicated region
        $region21: #{embedding_block_forward.1} parent=11 // pred_check
          %p149 = pneg %p102
        $region22: #{embedding_block_forward.1} parent=11 // pred_check_branch
          %151 = sbr.rel (%p149) target = $region24
        $region23: #{embedding_block_forward.1} parent=11 // pred_region
          _
        $region24: #{embedding_block_forward.1} parent=11 // pred_fallthru
          _
      $region12: #{embedding_block_forward.1} parent=5 // pred_fallthru
        _
      %p152 = scmp.lt.s32.totalorder %s13, 4
      // Predicated region
      $region25: #{embedding_block_forward.1} parent=5 // pred_check
        %p153 = pneg %p152
      $region26: #{embedding_block_forward.1} parent=5 // pred_check_branch
        %155 = sbr.rel (%p153) target = $region28
      $region27: #{embedding_block_forward.1} parent=5 // pred_region
        // Predicated region
        $region29: #{embedding_block_forward.1} parent=27 // pred_check
          %p156 = pneg %p33
        $region30: #{embedding_block_forward.1} parent=27 // pred_check_branch
          %158 = sbr.rel (%p156) target = $region32
        $region31: #{embedding_block_forward.1} parent=27 // pred_region
          %s159 = smul.u32 128, %s13
          %p160 = scmp.lt.s32.totalorder %s159, 511
          %s161 = scalar_select %p160, %s159, 511
          %s162 = smul.addr %s161, 4
          %s163 = scalar_lea.vmem %s0, %s162
          %s164 = smul.u32 128, %s13
        $region32: #{embedding_block_forward.1} parent=27 // pred_fallthru
          _
      $region28: #{embedding_block_forward.1} parent=5 // pred_fallthru
        _
      %p165 = scmp.le.s32.totalorder 1, %s13
      %p166 = scmp.lt.s32.totalorder %s13, 5
      %p167 = pnand %p165, %p166
      %p168 = pneg %p167
      // Predicated region
      $region33: #{embedding_block_forward.1} parent=5 // pred_check
        _
      $region34: #{embedding_block_forward.1} parent=5 // pred_check_branch
        %170 = sbr.rel (%p167) target = $region36
      $region35: #{embedding_block_forward.1} parent=5 // pred_region
        %s171 = ssub.s32 %s13, 1
        %s172 = smul.u32 128, %s18
        %p173 = scmp.lt.s32.totalorder %s172, 511
        %s174 = scalar_select %p173, %s172, 511
        %s175 = smul.addr %s174, 4
        %s176 = scalar_lea.vmem %s0, %s175
        %p177 = pneg %p39
        %p178 = pneg %p36
        %p179 = pneg %p60
        %p180 = pneg %p57
        %p181 = pneg %p81
        %p182 = pneg %p78
        %p183 = pneg %p102
        %p184 = pneg %p99
        %p185 = pneg %p128
        %p186 = pneg %p125
        %s187 = sand.u32 %s115, 1
        %s188 = scalar_lea.sflag [#allocation3], %s187
        %s189 = sand.u32 %s115, 1
        %s190 = smul.addr %s189, 1024
        %s191 = scalar_lea.vmem [#allocation2], %s190
        %s192 = smul.u32 128, %s18
        %p193 = scmp.lt.s32.totalorder %s192, 511
        %s194 = scalar_select %p193, %s192, 511
        %s195 = smul.addr %s194, 4
        %s196 = scalar_lea.vmem %s0, %s195
        %s197 = smul.u32 128, %s18
        %s198 = smul.u32 128, %s18
        %v200 = vlaneseq
        %v201 = vand.u32 %v200, 127
        %v202 = vadd.s32 %v201, 128
        loop: start=0, step=1, limit=4
        $region37: #{embedding_block_forward.1} parent=35 // loop_pre_header
          _
        $region38: #{embedding_block_forward.1} parent=35 // loop_header
          %s204 = sphi 0, %s208
          %p205 = scmp.ge.s32.totalorder %s204, 4
        $region39: #{embedding_block_forward.1} parent=35 // loop_header_branch
          %207 = sbr.rel (%p205) target = $region43
        $region40: #{embedding_block_forward.1} parent=35 // loop_body
          %s209 = smul.u32 %s204, 256
          %s210 = sshra.s32 %s209, 3
          %s211 = sand.u32 %s209, 7
          %s212 = smul.addr %s210, 4
          %s213 = scalar_lea.vmem %s196, %s212
          %v214 = vld [vmem:[%s213] sm:$0xf]
          %v215 = vld [vmem:[%s213 + $0x4] sm:$0xf]
          %v216 = vld [vmem:[%s213 + $0x8] sm:$0xf]
          %v217 = vld [vmem:[%s213 + $0xc] sm:$0xf]
          %v218 = vld [vmem:[%s213 + $0x10] sm:$0xf]
          %v219 = vld [vmem:[%s213 + $0x14] sm:$0xf]
          %v220 = vld [vmem:[%s213 + $0x18] sm:$0xf]
          %v221 = vld [vmem:[%s213 + $0x1c] sm:$0xf]
          %v222 = vld [vmem:[%s213 + $0x20] sm:$0xf]
          %v223 = vld [vmem:[%s213 + $0x24] sm:$0xf]
          %v224 = vld [vmem:[%s213 + $0x28] sm:$0xf]
          %v225 = vld [vmem:[%s213 + $0x2c] sm:$0xf]
          %v226 = vld [vmem:[%s213 + $0x30] sm:$0xf]
          %v227 = vld [vmem:[%s213 + $0x34] sm:$0xf]
          %v228 = vld [vmem:[%s213 + $0x38] sm:$0xf]
          %v229 = vld [vmem:[%s213 + $0x3c] sm:$0xf]
          %v230 = vld [vmem:[%s213 + $0x40] sm:$0xf]
          %v231 = vld [vmem:[%s213 + $0x44] sm:$0xf]
          %v232 = vld [vmem:[%s213 + $0x48] sm:$0xf]
          %v233 = vld [vmem:[%s213 + $0x4c] sm:$0xf]
          %v234 = vld [vmem:[%s213 + $0x50] sm:$0xf]
          %v235 = vld [vmem:[%s213 + $0x54] sm:$0xf]
          %v236 = vld [vmem:[%s213 + $0x58] sm:$0xf]
          %v237 = vld [vmem:[%s213 + $0x5c] sm:$0xf]
          %v238 = vld [vmem:[%s213 + $0x60] sm:$0xf]
          %v239 = vld [vmem:[%s213 + $0x64] sm:$0xf]
          %v240 = vld [vmem:[%s213 + $0x68] sm:$0xf]
          %v241 = vld [vmem:[%s213 + $0x6c] sm:$0xf]
          %v242 = vld [vmem:[%s213 + $0x70] sm:$0xf]
          %v243 = vld [vmem:[%s213 + $0x74] sm:$0xf]
          %v244 = vld [vmem:[%s213 + $0x78] sm:$0xf]
          %v245 = vld [vmem:[%s213 + $0x7c] sm:$0xf]
          %v246 = vld [vmem:[%s3] sm:$0xf]
          %v247 = vld [vmem:[%s3 + $0x4] sm:$0xf]
          %v280 = vunpack.c.l.b16 %v214
          %v281 = vunpack.c.l.b16 %v215
          %v282 = vunpack.c.l.b16 %v216
          %v283 = vunpack.c.l.b16 %v217
          %v284 = vunpack.c.l.b16 %v218
          %v285 = vunpack.c.l.b16 %v219
          %v286 = vunpack.c.l.b16 %v220
          %v287 = vunpack.c.l.b16 %v221
          %v288 = vunpack.c.l.b16 %v222
          %v289 = vunpack.c.l.b16 %v223
          %v290 = vunpack.c.l.b16 %v224
          %v291 = vunpack.c.l.b16 %v225
          %v292 = vunpack.c.l.b16 %v226
          %v293 = vunpack.c.l.b16 %v227
          %v294 = vunpack.c.l.b16 %v228
          %v295 = vunpack.c.l.b16 %v229
          %v296 = vunpack.c.l.b16 %v230
          %v297 = vunpack.c.l.b16 %v231
          %v298 = vunpack.c.l.b16 %v232
          %v299 = vunpack.c.l.b16 %v233
          %v300 = vunpack.c.l.b16 %v234
          %v301 = vunpack.c.l.b16 %v235
          %v302 = vunpack.c.l.b16 %v236
          %v303 = vunpack.c.l.b16 %v237
          %v304 = vunpack.c.l.b16 %v238
          %v305 = vunpack.c.l.b16 %v239
          %v306 = vunpack.c.l.b16 %v240
          %v307 = vunpack.c.l.b16 %v241
          %v308 = vunpack.c.l.b16 %v242
          %v309 = vunpack.c.l.b16 %v243
          %v310 = vunpack.c.l.b16 %v244
          %v311 = vunpack.c.l.b16 %v245
          %v312 = vpack.c.b16 %v281, %v280
          %v313 = vpack.c.b16 %v283, %v282
          %v314 = vpack.c.b16 %v285, %v284
          %v315 = vpack.c.b16 %v287, %v286
          %v316 = vpack.c.b16 %v289, %v288
          %v317 = vpack.c.b16 %v291, %v290
          %v318 = vpack.c.b16 %v293, %v292
          %v319 = vpack.c.b16 %v295, %v294
          %v320 = vpack.c.b16 %v297, %v296
          %v321 = vpack.c.b16 %v299, %v298
          %v322 = vpack.c.b16 %v301, %v300
          %v323 = vpack.c.b16 %v303, %v302
          %v324 = vpack.c.b16 %v305, %v304
          %v325 = vpack.c.b16 %v307, %v306
          %v326 = vpack.c.b16 %v309, %v308
          %v327 = vpack.c.b16 %v311, %v310
          %v330 = vunpack.c.l.b16 %v246
          %v331 = vunpack.c.l.b16 %v247
          %v332 = vpack.c.b16 %v331, %v330
          %vm334 = vcmask 130048
          %v336 = vsel %vm334, %v312, 0
          %v339 = vsel %vm334, %v313, 0
          %v342 = vsel %vm334, %v314, 0
          %v345 = vsel %vm334, %v315, 0
          %v348 = vsel %vm334, %v316, 0
          %v351 = vsel %vm334, %v317, 0
          %v354 = vsel %vm334, %v318, 0
          %v357 = vsel %vm334, %v319, 0
          %v360 = vsel %vm334, %v320, 0
          %v363 = vsel %vm334, %v321, 0
          %v366 = vsel %vm334, %v322, 0
          %v369 = vsel %vm334, %v323, 0
          %v372 = vsel %vm334, %v324, 0
          %v375 = vsel %vm334, %v325, 0
          %v378 = vsel %vm334, %v326, 0
          %v381 = vsel %vm334, %v327, 0
          %383 = vmatprep.subr.bf16.mxu0 0
          %384 = vmatpush1.bf16.msra.mxu0 %v332
          %385 = vmatprep.subr.bf16.mxu0 0
          %386 = vmatpush1.bf16.msra.mxu0 0
          %387 = vmatprep.subr.bf16.mxu0 0
          %388 = vmatpush1.bf16.msra.mxu0 0
          %389 = vmatprep.subr.bf16.mxu0 0
          %390 = vmatpush1.bf16.msra.mxu0 0
          %391 = vmatprep.subr.bf16.mxu0 0
          %392 = vmatpush1.bf16.msra.mxu0 0
          %393 = vmatprep.subr.bf16.mxu0 0
          %394 = vmatpush1.bf16.msra.mxu0 0
          %395 = vmatprep.subr.bf16.mxu0 0
          %396 = vmatpush1.bf16.msra.mxu0 0
          %397 = vmatprep.subr.bf16.mxu0 0
          %398 = vmatpush1.bf16.msra.mxu0 0
          %399 = vmatprep.subr.bf16.mxu0 0
          %400 = vmatpush1.bf16.msra.mxu0 0
          %401 = vmatprep.subr.bf16.mxu0 0
          %402 = vmatpush1.bf16.msra.mxu0 0
          %403 = vmatprep.subr.bf16.mxu0 0
          %404 = vmatpush1.bf16.msra.mxu0 0
          %405 = vmatprep.subr.bf16.mxu0 0
          %406 = vmatpush1.bf16.msra.mxu0 0
          %407 = vmatprep.subr.bf16.mxu0 0
          %408 = vmatpush1.bf16.msra.mxu0 0
          %409 = vmatprep.subr.bf16.mxu0 0
          %410 = vmatpush1.bf16.msra.mxu0 0
          %411 = vmatprep.subr.bf16.mxu0 0
          %412 = vmatpush1.bf16.msra.mxu0 0
          %413 = vmatprep.subr.bf16.mxu0 0
          %414 = vmatpush1.bf16.msra.mxu0 0
          %415 = vmatprep.mubr.bf16.mxu0 0
          %416 = vmatmul.mubr.bf16.gmra.mrb[0].mxu0 %v336
          %v417 = vpop.f32.mrb[0].mxu0
          %v418 = vadd.f32 0.0, %v417
          %v419 = vpop.f32.mrb[0].mxu0
          %v420 = vpop.f32.mrb[0].mxu0
          %v421 = vadd.f32 0.0, %v420
          %v422 = vpop.f32.mrb[0].mxu0
          %423 = vmatprep.mubr.bf16.mxu0 0
          %424 = vmatmul.mubr.bf16.gmra.mrb[0].mxu0 %v339
          %v425 = vpop.f32.mrb[0].mxu0
          %v426 = vadd.f32 0.0, %v425
          %v427 = vpop.f32.mrb[0].mxu0
          %v428 = vpop.f32.mrb[0].mxu0
          %v429 = vadd.f32 0.0, %v428
          %v430 = vpop.f32.mrb[0].mxu0
          %431 = vmatprep.mubr.bf16.mxu0 0
          %432 = vmatmul.mubr.bf16.gmra.mrb[0].mxu0 %v342
          %v433 = vpop.f32.mrb[0].mxu0
          %v434 = vadd.f32 0.0, %v433
          %v435 = vpop.f32.mrb[0].mxu0
          %v436 = vpop.f32.mrb[0].mxu0
          %v437 = vadd.f32 0.0, %v436
          %v438 = vpop.f32.mrb[0].mxu0
          %439 = vmatprep.mubr.bf16.mxu0 0
          %440 = vmatmul.mubr.bf16.gmra.mrb[0].mxu0 %v345
          %v441 = vpop.f32.mrb[0].mxu0
          %v442 = vadd.f32 0.0, %v441
          %v443 = vpop.f32.mrb[0].mxu0
          %v444 = vpop.f32.mrb[0].mxu0
          %v445 = vadd.f32 0.0, %v444
          %v446 = vpop.f32.mrb[0].mxu0
          %447 = vmatprep.mubr.bf16.mxu0 0
          %448 = vmatmul.mubr.bf16.gmra.mrb[0].mxu0 %v348
          %v449 = vpop.f32.mrb[0].mxu0
          %v450 = vadd.f32 0.0, %v449
          %v451 = vpop.f32.mrb[0].mxu0
          %v452 = vpop.f32.mrb[0].mxu0
          %v453 = vadd.f32 0.0, %v452
          %v454 = vpop.f32.mrb[0].mxu0
          %455 = vmatprep.mubr.bf16.mxu0 0
          %456 = vmatmul.mubr.bf16.gmra.mrb[0].mxu0 %v351
          %v457 = vpop.f32.mrb[0].mxu0
          %v458 = vadd.f32 0.0, %v457
          %v459 = vpop.f32.mrb[0].mxu0
          %v460 = vpop.f32.mrb[0].mxu0
          %v461 = vadd.f32 0.0, %v460
          %v462 = vpop.f32.mrb[0].mxu0
          %463 = vmatprep.mubr.bf16.mxu0 0
          %464 = vmatmul.mubr.bf16.gmra.mrb[0].mxu0 %v354
          %v465 = vpop.f32.mrb[0].mxu0
          %v466 = vadd.f32 0.0, %v465
          %v467 = vpop.f32.mrb[0].mxu0
          %v468 = vpop.f32.mrb[0].mxu0
          %v469 = vadd.f32 0.0, %v468
          %v470 = vpop.f32.mrb[0].mxu0
          %471 = vmatprep.mubr.bf16.mxu0 0
          %472 = vmatmul.mubr.bf16.gmra.mrb[0].mxu0 %v357
          %v473 = vpop.f32.mrb[0].mxu0
          %v474 = vadd.f32 0.0, %v473
          %v475 = vpop.f32.mrb[0].mxu0
          %v476 = vpop.f32.mrb[0].mxu0
          %v477 = vadd.f32 0.0, %v476
          %v478 = vpop.f32.mrb[0].mxu0
          %479 = vmatprep.mubr.bf16.mxu0 0
          %480 = vmatmul.mubr.bf16.gmra.mrb[0].mxu0 %v360
          %v481 = vpop.f32.mrb[0].mxu0
          %v482 = vadd.f32 0.0, %v481
          %v483 = vpop.f32.mrb[0].mxu0
          %v484 = vpop.f32.mrb[0].mxu0
          %v485 = vadd.f32 0.0, %v484
          %v486 = vpop.f32.mrb[0].mxu0
          %487 = vmatprep.mubr.bf16.mxu0 0
          %488 = vmatmul.mubr.bf16.gmra.mrb[0].mxu0 %v363
          %v489 = vpop.f32.mrb[0].mxu0
          %v490 = vadd.f32 0.0, %v489
          %v491 = vpop.f32.mrb[0].mxu0
          %v492 = vpop.f32.mrb[0].mxu0
          %v493 = vadd.f32 0.0, %v492
          %v494 = vpop.f32.mrb[0].mxu0
          %495 = vmatprep.mubr.bf16.mxu0 0
          %496 = vmatmul.mubr.bf16.gmra.mrb[0].mxu0 %v366
          %v497 = vpop.f32.mrb[0].mxu0
          %v498 = vadd.f32 0.0, %v497
          %v499 = vpop.f32.mrb[0].mxu0
          %v500 = vpop.f32.mrb[0].mxu0
          %v501 = vadd.f32 0.0, %v500
          %v502 = vpop.f32.mrb[0].mxu0
          %503 = vmatprep.mubr.bf16.mxu0 0
          %504 = vmatmul.mubr.bf16.gmra.mrb[0].mxu0 %v369
          %v505 = vpop.f32.mrb[0].mxu0
          %v506 = vadd.f32 0.0, %v505
          %v507 = vpop.f32.mrb[0].mxu0
          %v508 = vpop.f32.mrb[0].mxu0
          %v509 = vadd.f32 0.0, %v508
          %v510 = vpop.f32.mrb[0].mxu0
          %511 = vmatprep.mubr.bf16.mxu0 0
          %512 = vmatmul.mubr.bf16.gmra.mrb[0].mxu0 %v372
          %v513 = vpop.f32.mrb[0].mxu0
          %v514 = vadd.f32 0.0, %v513
          %v515 = vpop.f32.mrb[0].mxu0
          %v516 = vpop.f32.mrb[0].mxu0
          %v517 = vadd.f32 0.0, %v516
          %v518 = vpop.f32.mrb[0].mxu0
          %519 = vmatprep.mubr.bf16.mxu0 0
          %520 = vmatmul.mubr.bf16.gmra.mrb[0].mxu0 %v375
          %v521 = vpop.f32.mrb[0].mxu0
          %v522 = vadd.f32 0.0, %v521
          %v523 = vpop.f32.mrb[0].mxu0
          %v524 = vpop.f32.mrb[0].mxu0
          %v525 = vadd.f32 0.0, %v524
          %v526 = vpop.f32.mrb[0].mxu0
          %527 = vmatprep.mubr.bf16.mxu0 0
          %528 = vmatmul.mubr.bf16.gmra.mrb[0].mxu0 %v378
          %v529 = vpop.f32.mrb[0].mxu0
          %v530 = vadd.f32 0.0, %v529
          %v531 = vpop.f32.mrb[0].mxu0
          %v532 = vpop.f32.mrb[0].mxu0
          %v533 = vadd.f32 0.0, %v532
          %v534 = vpop.f32.mrb[0].mxu0
          %535 = vmatprep.mubr.bf16.mxu0 0
          %536 = vmatmul.mubr.bf16.gmra.mrb[0].mxu0 %v381
          %v537 = vpop.f32.mrb[0].mxu0
          %v538 = vadd.f32 0.0, %v537
          %v539 = vpop.f32.mrb[0].mxu0
          %v540 = vpop.f32.mrb[0].mxu0
          %v541 = vadd.f32 0.0, %v540
          %v542 = vpop.f32.mrb[0].mxu0
          %543 = vdwg.mxu0
          %v544 = vsub.f32 0.0, %v418
          %v545 = vsub.f32 0.0, %v421
          %v546 = vsub.f32 0.0, %v426
          %v547 = vsub.f32 0.0, %v429
          %v548 = vsub.f32 0.0, %v434
          %v549 = vsub.f32 0.0, %v437
          %v550 = vsub.f32 0.0, %v442
          %v551 = vsub.f32 0.0, %v445
          %v552 = vsub.f32 0.0, %v450
          %v553 = vsub.f32 0.0, %v453
          %v554 = vsub.f32 0.0, %v458
          %v555 = vsub.f32 0.0, %v461
          %v556 = vsub.f32 0.0, %v466
          %v557 = vsub.f32 0.0, %v469
          %v558 = vsub.f32 0.0, %v474
          %v559 = vsub.f32 0.0, %v477
          %v560 = vsub.f32 0.0, %v482
          %v561 = vsub.f32 0.0, %v485
          %v562 = vsub.f32 0.0, %v490
          %v563 = vsub.f32 0.0, %v493
          %v564 = vsub.f32 0.0, %v498
          %v565 = vsub.f32 0.0, %v501
          %v566 = vsub.f32 0.0, %v506
          %v567 = vsub.f32 0.0, %v509
          %v568 = vsub.f32 0.0, %v514
          %v569 = vsub.f32 0.0, %v517
          %v570 = vsub.f32 0.0, %v522
          %v571 = vsub.f32 0.0, %v525
          %v572 = vsub.f32 0.0, %v530
          %v573 = vsub.f32 0.0, %v533
          %v574 = vsub.f32 0.0, %v538
          %v575 = vsub.f32 0.0, %v541
          %v576 = vmul.f32 %v544, 1.442695
          %v577 = vpow.pop %v576
          %v578 = vmul.f32 %v545, 1.442695
          %v579 = vpow.pop %v578
          %v580 = vmul.f32 %v546, 1.442695
          %v581 = vpow.pop %v580
          %v582 = vmul.f32 %v547, 1.442695
          %v583 = vpow.pop %v582
          %v584 = vmul.f32 %v548, 1.442695
          %v585 = vpow.pop %v584
          %v586 = vmul.f32 %v549, 1.442695
          %v587 = vpow.pop %v586
          %v588 = vmul.f32 %v550, 1.442695
          %v589 = vpow.pop %v588
          %v590 = vmul.f32 %v551, 1.442695
          %v591 = vpow.pop %v590
          %v592 = vmul.f32 %v552, 1.442695
          %v593 = vpow.pop %v592
          %v594 = vmul.f32 %v553, 1.442695
          %v595 = vpow.pop %v594
          %v596 = vmul.f32 %v554, 1.442695
          %v597 = vpow.pop %v596
          %v598 = vmul.f32 %v555, 1.442695
          %v599 = vpow.pop %v598
          %v600 = vmul.f32 %v556, 1.442695
          %v601 = vpow.pop %v600
          %v602 = vmul.f32 %v557, 1.442695
          %v603 = vpow.pop %v602
          %v604 = vmul.f32 %v558, 1.442695
          %v605 = vpow.pop %v604
          %v606 = vmul.f32 %v559, 1.442695
          %v607 = vpow.pop %v606
          %v608 = vmul.f32 %v560, 1.442695
          %v609 = vpow.pop %v608
          %v610 = vmul.f32 %v561, 1.442695
          %v611 = vpow.pop %v610
          %v612 = vmul.f32 %v562, 1.442695
          %v613 = vpow.pop %v612
          %v614 = vmul.f32 %v563, 1.442695
          %v615 = vpow.pop %v614
          %v616 = vmul.f32 %v564, 1.442695
          %v617 = vpow.pop %v616
          %v618 = vmul.f32 %v565, 1.442695
          %v619 = vpow.pop %v618
          %v620 = vmul.f32 %v566, 1.442695
          %v621 = vpow.pop %v620
          %v622 = vmul.f32 %v567, 1.442695
          %v623 = vpow.pop %v622
          %v624 = vmul.f32 %v568, 1.442695
          %v625 = vpow.pop %v624
          %v626 = vmul.f32 %v569, 1.442695
          %v627 = vpow.pop %v626
          %v628 = vmul.f32 %v570, 1.442695
          %v629 = vpow.pop %v628
          %v630 = vmul.f32 %v571, 1.442695
          %v631 = vpow.pop %v630
          %v632 = vmul.f32 %v572, 1.442695
          %v633 = vpow.pop %v632
          %v634 = vmul.f32 %v573, 1.442695
          %v635 = vpow.pop %v634
          %v636 = vmul.f32 %v574, 1.442695
          %v637 = vpow.pop %v636
          %v638 = vmul.f32 %v575, 1.442695
          %v639 = vpow.pop %v638
          %v640 = vadd.f32 %v577, 1.0
          %v641 = vadd.f32 %v579, 1.0
          %v642 = vadd.f32 %v581, 1.0
          %v643 = vadd.f32 %v583, 1.0
          %v644 = vadd.f32 %v585, 1.0
          %v645 = vadd.f32 %v587, 1.0
          %v646 = vadd.f32 %v589, 1.0
          %v647 = vadd.f32 %v591, 1.0
          %v648 = vadd.f32 %v593, 1.0
          %v649 = vadd.f32 %v595, 1.0
          %v650 = vadd.f32 %v597, 1.0
          %v651 = vadd.f32 %v599, 1.0
          %v652 = vadd.f32 %v601, 1.0
          %v653 = vadd.f32 %v603, 1.0
          %v654 = vadd.f32 %v605, 1.0
          %v655 = vadd.f32 %v607, 1.0
          %v656 = vadd.f32 %v609, 1.0
          %v657 = vadd.f32 %v611, 1.0
          %v658 = vadd.f32 %v613, 1.0
          %v659 = vadd.f32 %v615, 1.0
          %v660 = vadd.f32 %v617, 1.0
          %v661 = vadd.f32 %v619, 1.0
          %v662 = vadd.f32 %v621, 1.0
          %v663 = vadd.f32 %v623, 1.0
          %v664 = vadd.f32 %v625, 1.0
          %v665 = vadd.f32 %v627, 1.0
          %v666 = vadd.f32 %v629, 1.0
          %v667 = vadd.f32 %v631, 1.0
          %v668 = vadd.f32 %v633, 1.0
          %v669 = vadd.f32 %v635, 1.0
          %v670 = vadd.f32 %v637, 1.0
          %v671 = vadd.f32 %v639, 1.0
          %v672 = vrcp.pop %v640
          %v673 = vrcp.pop %v641
          %v674 = vrcp.pop %v642
          %v675 = vrcp.pop %v643
          %v676 = vrcp.pop %v644
          %v677 = vrcp.pop %v645
          %v678 = vrcp.pop %v646
          %v679 = vrcp.pop %v647
          %v680 = vrcp.pop %v648
          %v681 = vrcp.pop %v649
          %v682 = vrcp.pop %v650
          %v683 = vrcp.pop %v651
          %v684 = vrcp.pop %v652
          %v685 = vrcp.pop %v653
          %v686 = vrcp.pop %v654
          %v687 = vrcp.pop %v655
          %v688 = vrcp.pop %v656
          %v689 = vrcp.pop %v657
          %v690 = vrcp.pop %v658
          %v691 = vrcp.pop %v659
          %v692 = vrcp.pop %v660
          %v693 = vrcp.pop %v661
          %v694 = vrcp.pop %v662
          %v695 = vrcp.pop %v663
          %v696 = vrcp.pop %v664
          %v697 = vrcp.pop %v665
          %v698 = vrcp.pop %v666
          %v699 = vrcp.pop %v667
          %v700 = vrcp.pop %v668
          %v701 = vrcp.pop %v669
          %v702 = vrcp.pop %v670
          %v703 = vrcp.pop %v671
          %v704 = vmul.f32 %v418, %v672
          %v705 = vmul.f32 %v421, %v673
          %v706 = vmul.f32 %v426, %v674
          %v707 = vmul.f32 %v429, %v675
          %v708 = vmul.f32 %v434, %v676
          %v709 = vmul.f32 %v437, %v677
          %v710 = vmul.f32 %v442, %v678
          %v711 = vmul.f32 %v445, %v679
          %v712 = vmul.f32 %v450, %v680
          %v713 = vmul.f32 %v453, %v681
          %v714 = vmul.f32 %v458, %v682
          %v715 = vmul.f32 %v461, %v683
          %v716 = vmul.f32 %v466, %v684
          %v717 = vmul.f32 %v469, %v685
          %v718 = vmul.f32 %v474, %v686
          %v719 = vmul.f32 %v477, %v687
          %v720 = vmul.f32 %v482, %v688
          %v721 = vmul.f32 %v485, %v689
          %v722 = vmul.f32 %v490, %v690
          %v723 = vmul.f32 %v493, %v691
          %v724 = vmul.f32 %v498, %v692
          %v725 = vmul.f32 %v501, %v693
          %v726 = vmul.f32 %v506, %v694
          %v727 = vmul.f32 %v509, %v695
          %v728 = vmul.f32 %v514, %v696
          %v729 = vmul.f32 %v517, %v697
          %v730 = vmul.f32 %v522, %v698
          %v731 = vmul.f32 %v525, %v699
          %v732 = vmul.f32 %v530, %v700
          %v733 = vmul.f32 %v533, %v701
          %v734 = vmul.f32 %v538, %v702
          %v735 = vmul.f32 %v541, %v703
          %v736 = vpack.c.bf16 %v705, %v704
          %v737 = vpack.c.bf16 %v707, %v706
          %v738 = vpack.c.bf16 %v709, %v708
          %v739 = vpack.c.bf16 %v711, %v710
          %v740 = vpack.c.bf16 %v713, %v712
          %v741 = vpack.c.bf16 %v715, %v714
          %v742 = vpack.c.bf16 %v717, %v716
          %v743 = vpack.c.bf16 %v719, %v718
          %v744 = vpack.c.bf16 %v721, %v720
          %v745 = vpack.c.bf16 %v723, %v722
          %v746 = vpack.c.bf16 %v725, %v724
          %v747 = vpack.c.bf16 %v727, %v726
          %v748 = vpack.c.bf16 %v729, %v728
          %v749 = vpack.c.bf16 %v731, %v730
          %v750 = vpack.c.bf16 %v733, %v732
          %v751 = vpack.c.bf16 %v735, %v734
          %v752 = vld [vmem:[%s2] sm:$0xf]
          %v753 = vld [vmem:[%s2 + $0x4] sm:$0xf]
          %v754 = vld [vmem:[%s2 + $0x8] sm:$0xf]
          %v755 = vld [vmem:[%s2 + $0xc] sm:$0xf]
          %v756 = vld [vmem:[%s2 + $0x10] sm:$0xf]
          %v757 = vld [vmem:[%s2 + $0x14] sm:$0xf]
          %v758 = vld [vmem:[%s2 + $0x18] sm:$0xf]
          %v759 = vld [vmem:[%s2 + $0x1c] sm:$0xf]
          %v760 = vld [vmem:[%s2 + $0x20] sm:$0xf]
          %v761 = vld [vmem:[%s2 + $0x24] sm:$0xf]
          %v762 = vld [vmem:[%s2 + $0x28] sm:$0xf]
          %v763 = vld [vmem:[%s2 + $0x2c] sm:$0xf]
          %v764 = vld [vmem:[%s2 + $0x30] sm:$0xf]
          %v765 = vld [vmem:[%s2 + $0x34] sm:$0xf]
          %v766 = vld [vmem:[%s2 + $0x38] sm:$0xf]
          %v767 = vld [vmem:[%s2 + $0x3c] sm:$0xf]
          %v768 = vunpack.c.l.bf16 %v214
          %v769 = vunpack.c.l.bf16 %v215
          %v770 = vunpack.c.l.bf16 %v216
          %v771 = vunpack.c.l.bf16 %v217
          %v772 = vunpack.c.l.bf16 %v218
          %v773 = vunpack.c.l.bf16 %v219
          %v774 = vunpack.c.l.bf16 %v220
          %v775 = vunpack.c.l.bf16 %v221
          %v776 = vunpack.c.l.bf16 %v222
          %v777 = vunpack.c.l.bf16 %v223
          %v778 = vunpack.c.l.bf16 %v224
          %v779 = vunpack.c.l.bf16 %v225
          %v780 = vunpack.c.l.bf16 %v226
          %v781 = vunpack.c.l.bf16 %v227
          %v782 = vunpack.c.l.bf16 %v228
          %v783 = vunpack.c.l.bf16 %v229
          %v784 = vunpack.c.l.bf16 %v230
          %v785 = vunpack.c.l.bf16 %v231
          %v786 = vunpack.c.l.bf16 %v232
          %v787 = vunpack.c.l.bf16 %v233
          %v788 = vunpack.c.l.bf16 %v234
          %v789 = vunpack.c.l.bf16 %v235
          %v790 = vunpack.c.l.bf16 %v236
          %v791 = vunpack.c.l.bf16 %v237
          %v792 = vunpack.c.l.bf16 %v238
          %v793 = vunpack.c.l.bf16 %v239
          %v794 = vunpack.c.l.bf16 %v240
          %v795 = vunpack.c.l.bf16 %v241
          %v796 = vunpack.c.l.bf16 %v242
          %v797 = vunpack.c.l.bf16 %v243
          %v798 = vunpack.c.l.bf16 %v244
          %v799 = vunpack.c.l.bf16 %v245
          %v800 = vcvt.f32.s32.to.zero.pseudo %v768
          %v801 = vcvt.f32.s32.to.zero.pseudo %v769
          %v802 = vcvt.f32.s32.to.zero.pseudo %v770
          %v803 = vcvt.f32.s32.to.zero.pseudo %v771
          %v804 = vcvt.f32.s32.to.zero.pseudo %v772
          %v805 = vcvt.f32.s32.to.zero.pseudo %v773
          %v806 = vcvt.f32.s32.to.zero.pseudo %v774
          %v807 = vcvt.f32.s32.to.zero.pseudo %v775
          %v808 = vcvt.f32.s32.to.zero.pseudo %v776
          %v809 = vcvt.f32.s32.to.zero.pseudo %v777
          %v810 = vcvt.f32.s32.to.zero.pseudo %v778
          %v811 = vcvt.f32.s32.to.zero.pseudo %v779
          %v812 = vcvt.f32.s32.to.zero.pseudo %v780
          %v813 = vcvt.f32.s32.to.zero.pseudo %v781
          %v814 = vcvt.f32.s32.to.zero.pseudo %v782
          %v815 = vcvt.f32.s32.to.zero.pseudo %v783
          %v816 = vcvt.f32.s32.to.zero.pseudo %v784
          %v817 = vcvt.f32.s32.to.zero.pseudo %v785
          %v818 = vcvt.f32.s32.to.zero.pseudo %v786
          %v819 = vcvt.f32.s32.to.zero.pseudo %v787
          %v820 = vcvt.f32.s32.to.zero.pseudo %v788
          %v821 = vcvt.f32.s32.to.zero.pseudo %v789
          %v822 = vcvt.f32.s32.to.zero.pseudo %v790
          %v823 = vcvt.f32.s32.to.zero.pseudo %v791
          %v824 = vcvt.f32.s32.to.zero.pseudo %v792
          %v825 = vcvt.f32.s32.to.zero.pseudo %v793
          %v826 = vcvt.f32.s32.to.zero.pseudo %v794
          %v827 = vcvt.f32.s32.to.zero.pseudo %v795
          %v828 = vcvt.f32.s32.to.zero.pseudo %v796
          %v829 = vcvt.f32.s32.to.zero.pseudo %v797
          %v830 = vcvt.f32.s32.to.zero.pseudo %v798
          %v831 = vcvt.f32.s32.to.zero.pseudo %v799
          %832 = vset.pattern.permute.xlu0 7
          %833 = vperm.xlu0 %832, %v800
          %v834 = vpop.permute.xlu0 %833
          %835 = vset.pattern.permute.xlu0 7
          %836 = vperm.xlu0 %835, %v801
          %v837 = vpop.permute.xlu0 %836
          %838 = vset.pattern.permute.xlu0 7
          %839 = vperm.xlu0 %838, %v802
          %v840 = vpop.permute.xlu0 %839
          %841 = vset.pattern.permute.xlu0 7
          %842 = vperm.xlu0 %841, %v803
          %v843 = vpop.permute.xlu0 %842
          %844 = vset.pattern.permute.xlu0 7
          %845 = vperm.xlu0 %844, %v804
          %v846 = vpop.permute.xlu0 %845
          %847 = vset.pattern.permute.xlu0 7
          %848 = vperm.xlu0 %847, %v805
          %v849 = vpop.permute.xlu0 %848
          %850 = vset.pattern.permute.xlu0 7
          %851 = vperm.xlu0 %850, %v806
          %v852 = vpop.permute.xlu0 %851
          %853 = vset.pattern.permute.xlu0 7
          %854 = vperm.xlu0 %853, %v807
          %v855 = vpop.permute.xlu0 %854
          %856 = vset.pattern.permute.xlu0 7
          %857 = vperm.xlu0 %856, %v808
          %v858 = vpop.permute.xlu0 %857
          %859 = vset.pattern.permute.xlu0 7
          %860 = vperm.xlu0 %859, %v809
          %v861 = vpop.permute.xlu0 %860
          %862 = vset.pattern.permute.xlu0 7
          %863 = vperm.xlu0 %862, %v810
          %v864 = vpop.permute.xlu0 %863
          %865 = vset.pattern.permute.xlu0 7
          %866 = vperm.xlu0 %865, %v811
          %v867 = vpop.permute.xlu0 %866
          %868 = vset.pattern.permute.xlu0 7
          %869 = vperm.xlu0 %868, %v812
          %v870 = vpop.permute.xlu0 %869
          %871 = vset.pattern.permute.xlu0 7
          %872 = vperm.xlu0 %871, %v813
          %v873 = vpop.permute.xlu0 %872
          %874 = vset.pattern.permute.xlu0 7
          %875 = vperm.xlu0 %874, %v814
          %v876 = vpop.permute.xlu0 %875
          %877 = vset.pattern.permute.xlu0 7
          %878 = vperm.xlu0 %877, %v815
          %v879 = vpop.permute.xlu0 %878
          %880 = vset.pattern.permute.xlu0 7
          %881 = vperm.xlu0 %880, %v816
          %v882 = vpop.permute.xlu0 %881
          %883 = vset.pattern.permute.xlu0 7
          %884 = vperm.xlu0 %883, %v817
          %v885 = vpop.permute.xlu0 %884
          %886 = vset.pattern.permute.xlu0 7
          %887 = vperm.xlu0 %886, %v818
          %v888 = vpop.permute.xlu0 %887
          %889 = vset.pattern.permute.xlu0 7
          %890 = vperm.xlu0 %889, %v819
          %v891 = vpop.permute.xlu0 %890
          %892 = vset.pattern.permute.xlu0 7
          %893 = vperm.xlu0 %892, %v820
          %v894 = vpop.permute.xlu0 %893
          %895 = vset.pattern.permute.xlu0 7
          %896 = vperm.xlu0 %895, %v821
          %v897 = vpop.permute.xlu0 %896
          %898 = vset.pattern.permute.xlu0 7
          %899 = vperm.xlu0 %898, %v822
          %v900 = vpop.permute.xlu0 %899
          %901 = vset.pattern.permute.xlu0 7
          %902 = vperm.xlu0 %901, %v823
          %v903 = vpop.permute.xlu0 %902
          %904 = vset.pattern.permute.xlu0 7
          %905 = vperm.xlu0 %904, %v824
          %v906 = vpop.permute.xlu0 %905
          %907 = vset.pattern.permute.xlu0 7
          %908 = vperm.xlu0 %907, %v825
          %v909 = vpop.permute.xlu0 %908
          %910 = vset.pattern.permute.xlu0 7
          %911 = vperm.xlu0 %910, %v826
          %v912 = vpop.permute.xlu0 %911
          %913 = vset.pattern.permute.xlu0 7
          %914 = vperm.xlu0 %913, %v827
          %v915 = vpop.permute.xlu0 %914
          %916 = vset.pattern.permute.xlu0 7
          %917 = vperm.xlu0 %916, %v828
          %v918 = vpop.permute.xlu0 %917
          %919 = vset.pattern.permute.xlu0 7
          %920 = vperm.xlu0 %919, %v829
          %v921 = vpop.permute.xlu0 %920
          %922 = vset.pattern.permute.xlu0 7
          %923 = vperm.xlu0 %922, %v830
          %v924 = vpop.permute.xlu0 %923
          %925 = vset.pattern.permute.xlu0 7
          %926 = vperm.xlu0 %925, %v831
          %v927 = vpop.permute.xlu0 %926
          %vm928 = vcmp.eq.s32.totalorder %v201, %v834
          %vm929 = vcmp.eq.s32.totalorder %v202, %v834
          %vm930 = vcmp.eq.s32.totalorder %v201, %v837
          %vm931 = vcmp.eq.s32.totalorder %v202, %v837
          %vm932 = vcmp.eq.s32.totalorder %v201, %v840
          %vm933 = vcmp.eq.s32.totalorder %v202, %v840
          %vm934 = vcmp.eq.s32.totalorder %v201, %v843
          %vm935 = vcmp.eq.s32.totalorder %v202, %v843
          %vm936 = vcmp.eq.s32.totalorder %v201, %v846
          %vm937 = vcmp.eq.s32.totalorder %v202, %v846
          %vm938 = vcmp.eq.s32.totalorder %v201, %v849
          %vm939 = vcmp.eq.s32.totalorder %v202, %v849
          %vm940 = vcmp.eq.s32.totalorder %v201, %v852
          %vm941 = vcmp.eq.s32.totalorder %v202, %v852
          %vm942 = vcmp.eq.s32.totalorder %v201, %v855
          %vm943 = vcmp.eq.s32.totalorder %v202, %v855
          %vm944 = vcmp.eq.s32.totalorder %v201, %v858
          %vm945 = vcmp.eq.s32.totalorder %v202, %v858
          %vm946 = vcmp.eq.s32.totalorder %v201, %v861
          %vm947 = vcmp.eq.s32.totalorder %v202, %v861
          %vm948 = vcmp.eq.s32.totalorder %v201, %v864
          %vm949 = vcmp.eq.s32.totalorder %v202, %v864
          %vm950 = vcmp.eq.s32.totalorder %v201, %v867
          %vm951 = vcmp.eq.s32.totalorder %v202, %v867
          %vm952 = vcmp.eq.s32.totalorder %v201, %v870
          %vm953 = vcmp.eq.s32.totalorder %v202, %v870
          %vm954 = vcmp.eq.s32.totalorder %v201, %v873
          %vm955 = vcmp.eq.s32.totalorder %v202, %v873
          %vm956 = vcmp.eq.s32.totalorder %v201, %v876
          %vm957 = vcmp.eq.s32.totalorder %v202, %v876
          %vm958 = vcmp.eq.s32.totalorder %v201, %v879
          %vm959 = vcmp.eq.s32.totalorder %v202, %v879
          %vm960 = vcmp.eq.s32.totalorder %v201, %v882
          %vm961 = vcmp.eq.s32.totalorder %v202, %v882
          %vm962 = vcmp.eq.s32.totalorder %v201, %v885
          %vm963 = vcmp.eq.s32.totalorder %v202, %v885
          %vm964 = vcmp.eq.s32.totalorder %v201, %v888
          %vm965 = vcmp.eq.s32.totalorder %v202, %v888
          %vm966 = vcmp.eq.s32.totalorder %v201, %v891
          %vm967 = vcmp.eq.s32.totalorder %v202, %v891
          %vm968 = vcmp.eq.s32.totalorder %v201, %v894
          %vm969 = vcmp.eq.s32.totalorder %v202, %v894
          %vm970 = vcmp.eq.s32.totalorder %v201, %v897
          %vm971 = vcmp.eq.s32.totalorder %v202, %v897
          %vm972 = vcmp.eq.s32.totalorder %v201, %v900
          %vm973 = vcmp.eq.s32.totalorder %v202, %v900
          %vm974 = vcmp.eq.s32.totalorder %v201, %v903
          %vm975 = vcmp.eq.s32.totalorder %v202, %v903
          %vm976 = vcmp.eq.s32.totalorder %v201, %v906
          %vm977 = vcmp.eq.s32.totalorder %v202, %v906
          %vm978 = vcmp.eq.s32.totalorder %v201, %v909
          %vm979 = vcmp.eq.s32.totalorder %v202, %v909
          %vm980 = vcmp.eq.s32.totalorder %v201, %v912
          %vm981 = vcmp.eq.s32.totalorder %v202, %v912
          %vm982 = vcmp.eq.s32.totalorder %v201, %v915
          %vm983 = vcmp.eq.s32.totalorder %v202, %v915
          %vm984 = vcmp.eq.s32.totalorder %v201, %v918
          %vm985 = vcmp.eq.s32.totalorder %v202, %v918
          %vm986 = vcmp.eq.s32.totalorder %v201, %v921
          %vm987 = vcmp.eq.s32.totalorder %v202, %v921
          %vm988 = vcmp.eq.s32.totalorder %v201, %v924
          %vm989 = vcmp.eq.s32.totalorder %v202, %v924
          %vm990 = vcmp.eq.s32.totalorder %v201, %v927
          %vm991 = vcmp.eq.s32.totalorder %v202, %v927
          %992 = vset.pattern.permute.xlu0 8
          %993 = vperm.xlu0 %992, %v800
          %v994 = vpop.permute.xlu0 %993
          %995 = vset.pattern.permute.xlu0 8
          %996 = vperm.xlu0 %995, %v801
          %v997 = vpop.permute.xlu0 %996
          %998 = vset.pattern.permute.xlu0 8
          %999 = vperm.xlu0 %998, %v802
          %v1000 = vpop.permute.xlu0 %999
          %1001 = vset.pattern.permute.xlu0 8
          %1002 = vperm.xlu0 %1001, %v803
          %v1003 = vpop.permute.xlu0 %1002
          %1004 = vset.pattern.permute.xlu0 8
          %1005 = vperm.xlu0 %1004, %v804
          %v1006 = vpop.permute.xlu0 %1005
          %1007 = vset.pattern.permute.xlu0 8
          %1008 = vperm.xlu0 %1007, %v805
          %v1009 = vpop.permute.xlu0 %1008
          %1010 = vset.pattern.permute.xlu0 8
          %1011 = vperm.xlu0 %1010, %v806
          %v1012 = vpop.permute.xlu0 %1011
          %1013 = vset.pattern.permute.xlu0 8
          %1014 = vperm.xlu0 %1013, %v807
          %v1015 = vpop.permute.xlu0 %1014
          %1016 = vset.pattern.permute.xlu0 8
          %1017 = vperm.xlu0 %1016, %v808
          %v1018 = vpop.permute.xlu0 %1017
          %1019 = vset.pattern.permute.xlu0 8
          %1020 = vperm.xlu0 %1019, %v809
          %v1021 = vpop.permute.xlu0 %1020
          %1022 = vset.pattern.permute.xlu0 8
          %1023 = vperm.xlu0 %1022, %v810
          %v1024 = vpop.permute.xlu0 %1023
          %1025 = vset.pattern.permute.xlu0 8
          %1026 = vperm.xlu0 %1025, %v811
          %v1027 = vpop.permute.xlu0 %1026
          %1028 = vset.pattern.permute.xlu0 8
          %1029 = vperm.xlu0 %1028, %v812
          %v1030 = vpop.permute.xlu0 %1029
          %1031 = vset.pattern.permute.xlu0 8
          %1032 = vperm.xlu0 %1031, %v813
          %v1033 = vpop.permute.xlu0 %1032
          %1034 = vset.pattern.permute.xlu0 8
          %1035 = vperm.xlu0 %1034, %v814
          %v1036 = vpop.permute.xlu0 %1035
          %1037 = vset.pattern.permute.xlu0 8
          %1038 = vperm.xlu0 %1037, %v815
          %v1039 = vpop.permute.xlu0 %1038
          %1040 = vset.pattern.permute.xlu0 8
          %1041 = vperm.xlu0 %1040, %v816
          %v1042 = vpop.permute.xlu0 %1041
          %1043 = vset.pattern.permute.xlu0 8
          %1044 = vperm.xlu0 %1043, %v817
          %v1045 = vpop.permute.xlu0 %1044
          %1046 = vset.pattern.permute.xlu0 8
          %1047 = vperm.xlu0 %1046, %v818
          %v1048 = vpop.permute.xlu0 %1047
          %1049 = vset.pattern.permute.xlu0 8
          %1050 = vperm.xlu0 %1049, %v819
          %v1051 = vpop.permute.xlu0 %1050
          %1052 = vset.pattern.permute.xlu0 8
          %1053 = vperm.xlu0 %1052, %v820
          %v1054 = vpop.permute.xlu0 %1053
          %1055 = vset.pattern.permute.xlu0 8
          %1056 = vperm.xlu0 %1055, %v821
          %v1057 = vpop.permute.xlu0 %1056
          %1058 = vset.pattern.permute.xlu0 8
          %1059 = vperm.xlu0 %1058, %v822
          %v1060 = vpop.permute.xlu0 %1059
          %1061 = vset.pattern.permute.xlu0 8
          %1062 = vperm.xlu0 %1061, %v823
          %v1063 = vpop.permute.xlu0 %1062
          %1064 = vset.pattern.permute.xlu0 8
          %1065 = vperm.xlu0 %1064, %v824
          %v1066 = vpop.permute.xlu0 %1065
          %1067 = vset.pattern.permute.xlu0 8
          %1068 = vperm.xlu0 %1067, %v825
          %v1069 = vpop.permute.xlu0 %1068
          %1070 = vset.pattern.permute.xlu0 8
          %1071 = vperm.xlu0 %1070, %v826
          %v1072 = vpop.permute.xlu0 %1071
          %1073 = vset.pattern.permute.xlu0 8
          %1074 = vperm.xlu0 %1073, %v827
          %v1075 = vpop.permute.xlu0 %1074
          %1076 = vset.pattern.permute.xlu0 8
          %1077 = vperm.xlu0 %1076, %v828
          %v1078 = vpop.permute.xlu0 %1077
          %1079 = vset.pattern.permute.xlu0 8
          %1080 = vperm.xlu0 %1079, %v829
          %v1081 = vpop.permute.xlu0 %1080
          %1082 = vset.pattern.permute.xlu0 8
          %1083 = vperm.xlu0 %1082, %v830
          %v1084 = vpop.permute.xlu0 %1083
          %1085 = vset.pattern.permute.xlu0 8
          %1086 = vperm.xlu0 %1085, %v831
          %v1087 = vpop.permute.xlu0 %1086
          %vm1088 = vcmp.eq.s32.totalorder %v201, %v994
          %vm1089 = vcmp.eq.s32.totalorder %v202, %v994
          %vm1090 = vcmp.eq.s32.totalorder %v201, %v997
          %vm1091 = vcmp.eq.s32.totalorder %v202, %v997
          %vm1092 = vcmp.eq.s32.totalorder %v201, %v1000
          %vm1093 = vcmp.eq.s32.totalorder %v202, %v1000
          %vm1094 = vcmp.eq.s32.totalorder %v201, %v1003
          %vm1095 = vcmp.eq.s32.totalorder %v202, %v1003
          %vm1096 = vcmp.eq.s32.totalorder %v201, %v1006
          %vm1097 = vcmp.eq.s32.totalorder %v202, %v1006
          %vm1098 = vcmp.eq.s32.totalorder %v201, %v1009
          %vm1099 = vcmp.eq.s32.totalorder %v202, %v1009
          %vm1100 = vcmp.eq.s32.totalorder %v201, %v1012
          %vm1101 = vcmp.eq.s32.totalorder %v202, %v1012
          %vm1102 = vcmp.eq.s32.totalorder %v201, %v1015
          %vm1103 = vcmp.eq.s32.totalorder %v202, %v1015
          %vm1104 = vcmp.eq.s32.totalorder %v201, %v1018
          %vm1105 = vcmp.eq.s32.totalorder %v202, %v1018
          %vm1106 = vcmp.eq.s32.totalorder %v201, %v1021
          %vm1107 = vcmp.eq.s32.totalorder %v202, %v1021
          %vm1108 = vcmp.eq.s32.totalorder %v201, %v1024
          %vm1109 = vcmp.eq.s32.totalorder %v202, %v1024
          %vm1110 = vcmp.eq.s32.totalorder %v201, %v1027
          %vm1111 = vcmp.eq.s32.totalorder %v202, %v1027
          %vm1112 = vcmp.eq.s32.totalorder %v201, %v1030
          %vm1113 = vcmp.eq.s32.totalorder %v202, %v1030
          %vm1114 = vcmp.eq.s32.totalorder %v201, %v1033
          %vm1115 = vcmp.eq.s32.totalorder %v202, %v1033
          %vm1116 = vcmp.eq.s32.totalorder %v201, %v1036
          %vm1117 = vcmp.eq.s32.totalorder %v202, %v1036
          %vm1118 = vcmp.eq.s32.totalorder %v201, %v1039
          %vm1119 = vcmp.eq.s32.totalorder %v202, %v1039
          %vm1120 = vcmp.eq.s32.totalorder %v201, %v1042
          %vm1121 = vcmp.eq.s32.totalorder %v202, %v1042
          %vm1122 = vcmp.eq.s32.totalorder %v201, %v1045
          %vm1123 = vcmp.eq.s32.totalorder %v202, %v1045
          %vm1124 = vcmp.eq.s32.totalorder %v201, %v1048
          %vm1125 = vcmp.eq.s32.totalorder %v202, %v1048
          %vm1126 = vcmp.eq.s32.totalorder %v201, %v1051
          %vm1127 = vcmp.eq.s32.totalorder %v202, %v1051
          %vm1128 = vcmp.eq.s32.totalorder %v201, %v1054
          %vm1129 = vcmp.eq.s32.totalorder %v202, %v1054
          %vm1130 = vcmp.eq.s32.totalorder %v201, %v1057
          %vm1131 = vcmp.eq.s32.totalorder %v202, %v1057
          %vm1132 = vcmp.eq.s32.totalorder %v201, %v1060
          %vm1133 = vcmp.eq.s32.totalorder %v202, %v1060
          %vm1134 = vcmp.eq.s32.totalorder %v201, %v1063
          %vm1135 = vcmp.eq.s32.totalorder %v202, %v1063
          %vm1136 = vcmp.eq.s32.totalorder %v201, %v1066
          %vm1137 = vcmp.eq.s32.totalorder %v202, %v1066
          %vm1138 = vcmp.eq.s32.totalorder %v201, %v1069
          %vm1139 = vcmp.eq.s32.totalorder %v202, %v1069
          %vm1140 = vcmp.eq.s32.totalorder %v201, %v1072
          %vm1141 = vcmp.eq.s32.totalorder %v202, %v1072
          %vm1142 = vcmp.eq.s32.totalorder %v201, %v1075
          %vm1143 = vcmp.eq.s32.totalorder %v202, %v1075
          %vm1144 = vcmp.eq.s32.totalorder %v201, %v1078
          %vm1145 = vcmp.eq.s32.totalorder %v202, %v1078
          %vm1146 = vcmp.eq.s32.totalorder %v201, %v1081
          %vm1147 = vcmp.eq.s32.totalorder %v202, %v1081
          %vm1148 = vcmp.eq.s32.totalorder %v201, %v1084
          %vm1149 = vcmp.eq.s32.totalorder %v202, %v1084
          %vm1150 = vcmp.eq.s32.totalorder %v201, %v1087
          %vm1151 = vcmp.eq.s32.totalorder %v202, %v1087
          %vm1152 = vmor %vm928, %vm1088
          %vm1153 = vmor %vm929, %vm1089
          %vm1154 = vmor %vm930, %vm1090
          %vm1155 = vmor %vm931, %vm1091
          %vm1156 = vmor %vm932, %vm1092
          %vm1157 = vmor %vm933, %vm1093
          %vm1158 = vmor %vm934, %vm1094
          %vm1159 = vmor %vm935, %vm1095
          %vm1160 = vmor %vm936, %vm1096
          %vm1161 = vmor %vm937, %vm1097
          %vm1162 = vmor %vm938, %vm1098
          %vm1163 = vmor %vm939, %vm1099
          %vm1164 = vmor %vm940, %vm1100
          %vm1165 = vmor %vm941, %vm1101
          %vm1166 = vmor %vm942, %vm1102
          %vm1167 = vmor %vm943, %vm1103
          %vm1168 = vmor %vm944, %vm1104
          %vm1169 = vmor %vm945, %vm1105
          %vm1170 = vmor %vm946, %vm1106
          %vm1171 = vmor %vm947, %vm1107
          %vm1172 = vmor %vm948, %vm1108
          %vm1173 = vmor %vm949, %vm1109
          %vm1174 = vmor %vm950, %vm1110
          %vm1175 = vmor %vm951, %vm1111
          %vm1176 = vmor %vm952, %vm1112
          %vm1177 = vmor %vm953, %vm1113
          %vm1178 = vmor %vm954, %vm1114
          %vm1179 = vmor %vm955, %vm1115
          %vm1180 = vmor %vm956, %vm1116
          %vm1181 = vmor %vm957, %vm1117
          %vm1182 = vmor %vm958, %vm1118
          %vm1183 = vmor %vm959, %vm1119
          %vm1184 = vmor %vm960, %vm1120
          %vm1185 = vmor %vm961, %vm1121
          %vm1186 = vmor %vm962, %vm1122
          %vm1187 = vmor %vm963, %vm1123
          %vm1188 = vmor %vm964, %vm1124
          %vm1189 = vmor %vm965, %vm1125
          %vm1190 = vmor %vm966, %vm1126
          %vm1191 = vmor %vm967, %vm1127
          %vm1192 = vmor %vm968, %vm1128
          %vm1193 = vmor %vm969, %vm1129
          %vm1194 = vmor %vm970, %vm1130
          %vm1195 = vmor %vm971, %vm1131
          %vm1196 = vmor %vm972, %vm1132
          %vm1197 = vmor %vm973, %vm1133
          %vm1198 = vmor %vm974, %vm1134
          %vm1199 = vmor %vm975, %vm1135
          %vm1200 = vmor %vm976, %vm1136
          %vm1201 = vmor %vm977, %vm1137
          %vm1202 = vmor %vm978, %vm1138
          %vm1203 = vmor %vm979, %vm1139
          %vm1204 = vmor %vm980, %vm1140
          %vm1205 = vmor %vm981, %vm1141
          %vm1206 = vmor %vm982, %vm1142
          %vm1207 = vmor %vm983, %vm1143
          %vm1208 = vmor %vm984, %vm1144
          %vm1209 = vmor %vm985, %vm1145
          %vm1210 = vmor %vm986, %vm1146
          %vm1211 = vmor %vm987, %vm1147
          %vm1212 = vmor %vm988, %vm1148
          %vm1213 = vmor %vm989, %vm1149
          %vm1214 = vmor %vm990, %vm1150
          %vm1215 = vmor %vm991, %vm1151
          %v1216 = vsel %vm1152, 1, 0
          %v1217 = vsel %vm1153, 1, 0
          %v1218 = vsel %vm1154, 1, 0
          %v1219 = vsel %vm1155, 1, 0
          %v1220 = vsel %vm1156, 1, 0
          %v1221 = vsel %vm1157, 1, 0
          %v1222 = vsel %vm1158, 1, 0
          %v1223 = vsel %vm1159, 1, 0
          %v1224 = vsel %vm1160, 1, 0
          %v1225 = vsel %vm1161, 1, 0
          %v1226 = vsel %vm1162, 1, 0
          %v1227 = vsel %vm1163, 1, 0
          %v1228 = vsel %vm1164, 1, 0
          %v1229 = vsel %vm1165, 1, 0
          %v1230 = vsel %vm1166, 1, 0
          %v1231 = vsel %vm1167, 1, 0
          %v1232 = vsel %vm1168, 1, 0
          %v1233 = vsel %vm1169, 1, 0
          %v1234 = vsel %vm1170, 1, 0
          %v1235 = vsel %vm1171, 1, 0
          %v1236 = vsel %vm1172, 1, 0
          %v1237 = vsel %vm1173, 1, 0
          %v1238 = vsel %vm1174, 1, 0
          %v1239 = vsel %vm1175, 1, 0
          %v1240 = vsel %vm1176, 1, 0
          %v1241 = vsel %vm1177, 1, 0
          %v1242 = vsel %vm1178, 1, 0
          %v1243 = vsel %vm1179, 1, 0
          %v1244 = vsel %vm1180, 1, 0
          %v1245 = vsel %vm1181, 1, 0
          %v1246 = vsel %vm1182, 1, 0
          %v1247 = vsel %vm1183, 1, 0
          %v1248 = vsel %vm1184, 1, 0
          %v1249 = vsel %vm1185, 1, 0
          %v1250 = vsel %vm1186, 1, 0
          %v1251 = vsel %vm1187, 1, 0
          %v1252 = vsel %vm1188, 1, 0
          %v1253 = vsel %vm1189, 1, 0
          %v1254 = vsel %vm1190, 1, 0
          %v1255 = vsel %vm1191, 1, 0
          %v1256 = vsel %vm1192, 1, 0
          %v1257 = vsel %vm1193, 1, 0
          %v1258 = vsel %vm1194, 1, 0
          %v1259 = vsel %vm1195, 1, 0
          %v1260 = vsel %vm1196, 1, 0
          %v1261 = vsel %vm1197, 1, 0
          %v1262 = vsel %vm1198, 1, 0
          %v1263 = vsel %vm1199, 1, 0
          %v1264 = vsel %vm1200, 1, 0
          %v1265 = vsel %vm1201, 1, 0
          %v1266 = vsel %vm1202, 1, 0
          %v1267 = vsel %vm1203, 1, 0
          %v1268 = vsel %vm1204, 1, 0
          %v1269 = vsel %vm1205, 1, 0
          %v1270 = vsel %vm1206, 1, 0
          %v1271 = vsel %vm1207, 1, 0
          %v1272 = vsel %vm1208, 1, 0
          %v1273 = vsel %vm1209, 1, 0
          %v1274 = vsel %vm1210, 1, 0
          %v1275 = vsel %vm1211, 1, 0
          %v1276 = vsel %vm1212, 1, 0
          %v1277 = vsel %vm1213, 1, 0
          %v1278 = vsel %vm1214, 1, 0
          %v1279 = vsel %vm1215, 1, 0
          %v1280 = vcvt.s32.f32 %v1216
          %v1281 = vcvt.s32.f32 %v1217
          %v1282 = vcvt.s32.f32 %v1218
          %v1283 = vcvt.s32.f32 %v1219
          %v1284 = vcvt.s32.f32 %v1220
          %v1285 = vcvt.s32.f32 %v1221
          %v1286 = vcvt.s32.f32 %v1222
          %v1287 = vcvt.s32.f32 %v1223
          %v1288 = vcvt.s32.f32 %v1224
          %v1289 = vcvt.s32.f32 %v1225
          %v1290 = vcvt.s32.f32 %v1226
          %v1291 = vcvt.s32.f32 %v1227
          %v1292 = vcvt.s32.f32 %v1228
          %v1293 = vcvt.s32.f32 %v1229
          %v1294 = vcvt.s32.f32 %v1230
          %v1295 = vcvt.s32.f32 %v1231
          %v1296 = vcvt.s32.f32 %v1232
          %v1297 = vcvt.s32.f32 %v1233
          %v1298 = vcvt.s32.f32 %v1234
          %v1299 = vcvt.s32.f32 %v1235
          %v1300 = vcvt.s32.f32 %v1236
          %v1301 = vcvt.s32.f32 %v1237
          %v1302 = vcvt.s32.f32 %v1238
          %v1303 = vcvt.s32.f32 %v1239
          %v1304 = vcvt.s32.f32 %v1240
          %v1305 = vcvt.s32.f32 %v1241
          %v1306 = vcvt.s32.f32 %v1242
          %v1307 = vcvt.s32.f32 %v1243
          %v1308 = vcvt.s32.f32 %v1244
          %v1309 = vcvt.s32.f32 %v1245
          %v1310 = vcvt.s32.f32 %v1246
          %v1311 = vcvt.s32.f32 %v1247
          %v1312 = vcvt.s32.f32 %v1248
          %v1313 = vcvt.s32.f32 %v1249
          %v1314 = vcvt.s32.f32 %v1250
          %v1315 = vcvt.s32.f32 %v1251
          %v1316 = vcvt.s32.f32 %v1252
          %v1317 = vcvt.s32.f32 %v1253
          %v1318 = vcvt.s32.f32 %v1254
          %v1319 = vcvt.s32.f32 %v1255
          %v1320 = vcvt.s32.f32 %v1256
          %v1321 = vcvt.s32.f32 %v1257
          %v1322 = vcvt.s32.f32 %v1258
          %v1323 = vcvt.s32.f32 %v1259
          %v1324 = vcvt.s32.f32 %v1260
          %v1325 = vcvt.s32.f32 %v1261
          %v1326 = vcvt.s32.f32 %v1262
          %v1327 = vcvt.s32.f32 %v1263
          %v1328 = vcvt.s32.f32 %v1264
          %v1329 = vcvt.s32.f32 %v1265
          %v1330 = vcvt.s32.f32 %v1266
          %v1331 = vcvt.s32.f32 %v1267
          %v1332 = vcvt.s32.f32 %v1268
          %v1333 = vcvt.s32.f32 %v1269
          %v1334 = vcvt.s32.f32 %v1270
          %v1335 = vcvt.s32.f32 %v1271
          %v1336 = vcvt.s32.f32 %v1272
          %v1337 = vcvt.s32.f32 %v1273
          %v1338 = vcvt.s32.f32 %v1274
          %v1339 = vcvt.s32.f32 %v1275
          %v1340 = vcvt.s32.f32 %v1276
          %v1341 = vcvt.s32.f32 %v1277
          %v1342 = vcvt.s32.f32 %v1278
          %v1343 = vcvt.s32.f32 %v1279
          %v1344 = vpack.c.bf16 %v1282, %v1280
          %v1345 = vpack.c.bf16 %v1283, %v1281
          %v1346 = vpack.c.bf16 %v1286, %v1284
          %v1347 = vpack.c.bf16 %v1287, %v1285
          %v1348 = vpack.c.bf16 %v1290, %v1288
          %v1349 = vpack.c.bf16 %v1291, %v1289
          %v1350 = vpack.c.bf16 %v1294, %v1292
          %v1351 = vpack.c.bf16 %v1295, %v1293
          %v1352 = vpack.c.bf16 %v1298, %v1296
          %v1353 = vpack.c.bf16 %v1299, %v1297
          %v1354 = vpack.c.bf16 %v1302, %v1300
          %v1355 = vpack.c.bf16 %v1303, %v1301
          %v1356 = vpack.c.bf16 %v1306, %v1304
          %v1357 = vpack.c.bf16 %v1307, %v1305
          %v1358 = vpack.c.bf16 %v1310, %v1308
          %v1359 = vpack.c.bf16 %v1311, %v1309
          %v1360 = vpack.c.bf16 %v1314, %v1312
          %v1361 = vpack.c.bf16 %v1315, %v1313
          %v1362 = vpack.c.bf16 %v1318, %v1316
          %v1363 = vpack.c.bf16 %v1319, %v1317
          %v1364 = vpack.c.bf16 %v1322, %v1320
          %v1365 = vpack.c.bf16 %v1323, %v1321
          %v1366 = vpack.c.bf16 %v1326, %v1324
          %v1367 = vpack.c.bf16 %v1327, %v1325
          %v1368 = vpack.c.bf16 %v1330, %v1328
          %v1369 = vpack.c.bf16 %v1331, %v1329
          %v1370 = vpack.c.bf16 %v1334, %v1332
          %v1371 = vpack.c.bf16 %v1335, %v1333
          %v1372 = vpack.c.bf16 %v1338, %v1336
          %v1373 = vpack.c.bf16 %v1339, %v1337
          %v1374 = vpack.c.bf16 %v1342, %v1340
          %v1375 = vpack.c.bf16 %v1343, %v1341
          %v1376 = vld [vmem:[%s1] sm:$0xf]
          %v1377 = vld [vmem:[%s1 + $0x4] sm:$0xf]
          %v1378 = vld [vmem:[%s1 + $0x8] sm:$0xf]
          %v1379 = vld [vmem:[%s1 + $0xc] sm:$0xf]
          %v1380 = vld [vmem:[%s1 + $0x10] sm:$0xf]
          %v1381 = vld [vmem:[%s1 + $0x14] sm:$0xf]
          %v1382 = vld [vmem:[%s1 + $0x18] sm:$0xf]
          %v1383 = vld [vmem:[%s1 + $0x1c] sm:$0xf]
          %v1384 = vld [vmem:[%s1 + $0x20] sm:$0xf]
          %v1385 = vld [vmem:[%s1 + $0x24] sm:$0xf]
          %v1386 = vld [vmem:[%s1 + $0x28] sm:$0xf]
          %v1387 = vld [vmem:[%s1 + $0x2c] sm:$0xf]
          %v1388 = vld [vmem:[%s1 + $0x30] sm:$0xf]
          %v1389 = vld [vmem:[%s1 + $0x34] sm:$0xf]
          %v1390 = vld [vmem:[%s1 + $0x38] sm:$0xf]
          %v1391 = vld [vmem:[%s1 + $0x3c] sm:$0xf]
          %v1392 = vld [vmem:[%s1 + $0x40] sm:$0xf]
          %v1393 = vld [vmem:[%s1 + $0x44] sm:$0xf]
          %v1394 = vld [vmem:[%s1 + $0x48] sm:$0xf]
          %v1395 = vld [vmem:[%s1 + $0x4c] sm:$0xf]
          %v1396 = vld [vmem:[%s1 + $0x50] sm:$0xf]
          %v1397 = vld [vmem:[%s1 + $0x54] sm:$0xf]
          %v1398 = vld [vmem:[%s1 + $0x58] sm:$0xf]
          %v1399 = vld [vmem:[%s1 + $0x5c] sm:$0xf]
          %v1400 = vld [vmem:[%s1 + $0x60] sm:$0xf]
          %v1401 = vld [vmem:[%s1 + $0x64] sm:$0xf]
          %v1402 = vld [vmem:[%s1 + $0x68] sm:$0xf]
          %v1403 = vld [vmem:[%s1 + $0x6c] sm:$0xf]
          %v1404 = vld [vmem:[%s1 + $0x70] sm:$0xf]
          %v1405 = vld [vmem:[%s1 + $0x74] sm:$0xf]
          %v1406 = vld [vmem:[%s1 + $0x78] sm:$0xf]
          %v1407 = vld [vmem:[%s1 + $0x7c] sm:$0xf]
          %v1440 = vunpack.c.l.b16 %v1376
          %v1441 = vunpack.c.l.b16 %v1377
          %v1442 = vunpack.c.l.b16 %v1378
          %v1443 = vunpack.c.l.b16 %v1379
          %v1444 = vunpack.c.l.b16 %v1380
          %v1445 = vunpack.c.l.b16 %v1381
          %v1446 = vunpack.c.l.b16 %v1382
          %v1447 = vunpack.c.l.b16 %v1383
          %v1448 = vunpack.c.l.b16 %v1384
          %v1449 = vunpack.c.l.b16 %v1385
          %v1450 = vunpack.c.l.b16 %v1386
          %v1451 = vunpack.c.l.b16 %v1387
          %v1452 = vunpack.c.l.b16 %v1388
          %v1453 = vunpack.c.l.b16 %v1389
          %v1454 = vunpack.c.l.b16 %v1390
          %v1455 = vunpack.c.l.b16 %v1391
          %v1456 = vunpack.c.l.b16 %v1392
          %v1457 = vunpack.c.l.b16 %v1393
          %v1458 = vunpack.c.l.b16 %v1394
          %v1459 = vunpack.c.l.b16 %v1395
          %v1460 = vunpack.c.l.b16 %v1396
          %v1461 = vunpack.c.l.b16 %v1397
          %v1462 = vunpack.c.l.b16 %v1398
          %v1463 = vunpack.c.l.b16 %v1399
          %v1464 = vunpack.c.l.b16 %v1400
          %v1465 = vunpack.c.l.b16 %v1401
          %v1466 = vunpack.c.l.b16 %v1402
          %v1467 = vunpack.c.l.b16 %v1403
          %v1468 = vunpack.c.l.b16 %v1404
          %v1469 = vunpack.c.l.b16 %v1405
          %v1470 = vunpack.c.l.b16 %v1406
          %v1471 = vunpack.c.l.b16 %v1407
          %v1472 = vpack.c.b16 %v1441, %v1440
          %v1473 = vpack.c.b16 %v1443, %v1442
          %v1474 = vpack.c.b16 %v1445, %v1444
          %v1475 = vpack.c.b16 %v1447, %v1446
          %v1476 = vpack.c.b16 %v1449, %v1448
          %v1477 = vpack.c.b16 %v1451, %v1450
          %v1478 = vpack.c.b16 %v1453, %v1452
          %v1479 = vpack.c.b16 %v1455, %v1454
          %v1480 = vpack.c.b16 %v1457, %v1456
          %v1481 = vpack.c.b16 %v1459, %v1458
          %v1482 = vpack.c.b16 %v1461, %v1460
          %v1483 = vpack.c.b16 %v1463, %v1462
          %v1484 = vpack.c.b16 %v1465, %v1464
          %v1485 = vpack.c.b16 %v1467, %v1466
          %v1486 = vpack.c.b16 %v1469, %v1468
          %v1487 = vpack.c.b16 %v1471, %v1470
          %1504 = vmatprep.subr.bf16.mxu0 0
          %1505 = vmatpush1.bf16.msra.mxu0 %v1472
          %1506 = vmatprep.subr.bf16.mxu0 0
          %1507 = vmatpush1.bf16.msra.mxu0 %v1473
          %1508 = vmatprep.subr.bf16.mxu0 0
          %1509 = vmatpush1.bf16.msra.mxu0 %v1474
          %1510 = vmatprep.subr.bf16.mxu0 0
          %1511 = vmatpush1.bf16.msra.mxu0 %v1475
          %1512 = vmatprep.subr.bf16.mxu0 0
          %1513 = vmatpush1.bf16.msra.mxu0 %v1476
          %1514 = vmatprep.subr.bf16.mxu0 0
          %1515 = vmatpush1.bf16.msra.mxu0 %v1477
          %1516 = vmatprep.subr.bf16.mxu0 0
          %1517 = vmatpush1.bf16.msra.mxu0 %v1478
          %1518 = vmatprep.subr.bf16.mxu0 0
          %1519 = vmatpush1.bf16.msra.mxu0 %v1479
          %1520 = vmatprep.subr.bf16.mxu0 0
          %1521 = vmatpush1.bf16.msra.mxu0 %v1480
          %1522 = vmatprep.subr.bf16.mxu0 0
          %1523 = vmatpush1.bf16.msra.mxu0 %v1481
          %1524 = vmatprep.subr.bf16.mxu0 0
          %1525 = vmatpush1.bf16.msra.mxu0 %v1482
          %1526 = vmatprep.subr.bf16.mxu0 0
          %1527 = vmatpush1.bf16.msra.mxu0 %v1483
          %1528 = vmatprep.subr.bf16.mxu0 0
          %1529 = vmatpush1.bf16.msra.mxu0 %v1484
          %1530 = vmatprep.subr.bf16.mxu0 0
          %1531 = vmatpush1.bf16.msra.mxu0 %v1485
          %1532 = vmatprep.subr.bf16.mxu0 0
          %1533 = vmatpush1.bf16.msra.mxu0 %v1486
          %1534 = vmatprep.subr.bf16.mxu0 0
          %1535 = vmatpush1.bf16.msra.mxu0 %v1487
          %1536 = vmatprep.mubr.bf16.mxu0 %v1345
          %1537 = vmatmul.mubr.bf16.gmra.mrb[0].mxu0 %v1344
          %v1538 = vpop.f32.mrb[0].mxu0
          %v1539 = vadd.f32 0.0, %v1538
          %v1540 = vpop.f32.mrb[0].mxu0
          %v1541 = vpop.f32.mrb[0].mxu0
          %v1542 = vadd.f32 0.0, %v1541
          %v1543 = vpop.f32.mrb[0].mxu0
          %1544 = vmatprep.mubr.bf16.mxu0 %v1347
          %1545 = vmatmul.mubr.bf16.gmra.mrb[0].mxu0 %v1346
          %v1546 = vpop.f32.mrb[0].mxu0
          %v1547 = vadd.f32 0.0, %v1546
          %v1548 = vpop.f32.mrb[0].mxu0
          %v1549 = vpop.f32.mrb[0].mxu0
          %v1550 = vadd.f32 0.0, %v1549
          %v1551 = vpop.f32.mrb[0].mxu0
          %1552 = vmatprep.mubr.bf16.mxu0 %v1349
          %1553 = vmatmul.mubr.bf16.gmra.mrb[0].mxu0 %v1348
          %v1554 = vpop.f32.mrb[0].mxu0
          %v1555 = vadd.f32 0.0, %v1554
          %v1556 = vpop.f32.mrb[0].mxu0
          %v1557 = vpop.f32.mrb[0].mxu0
          %v1558 = vadd.f32 0.0, %v1557
          %v1559 = vpop.f32.mrb[0].mxu0
          %1560 = vmatprep.mubr.bf16.mxu0 %v1351
          %1561 = vmatmul.mubr.bf16.gmra.mrb[0].mxu0 %v1350
          %v1562 = vpop.f32.mrb[0].mxu0
          %v1563 = vadd.f32 0.0, %v1562
          %v1564 = vpop.f32.mrb[0].mxu0
          %v1565 = vpop.f32.mrb[0].mxu0
          %v1566 = vadd.f32 0.0, %v1565
          %v1567 = vpop.f32.mrb[0].mxu0
          %1568 = vmatprep.mubr.bf16.mxu0 %v1353
          %1569 = vmatmul.mubr.bf16.gmra.mrb[0].mxu0 %v1352
          %v1570 = vpop.f32.mrb[0].mxu0
          %v1571 = vadd.f32 0.0, %v1570
          %v1572 = vpop.f32.mrb[0].mxu0
          %v1573 = vpop.f32.mrb[0].mxu0
          %v1574 = vadd.f32 0.0, %v1573
          %v1575 = vpop.f32.mrb[0].mxu0
          %1576 = vmatprep.mubr.bf16.mxu0 %v1355
          %1577 = vmatmul.mubr.bf16.gmra.mrb[0].mxu0 %v1354
          %v1578 = vpop.f32.mrb[0].mxu0
          %v1579 = vadd.f32 0.0, %v1578
          %v1580 = vpop.f32.mrb[0].mxu0
          %v1581 = vpop.f32.mrb[0].mxu0
          %v1582 = vadd.f32 0.0, %v1581
          %v1583 = vpop.f32.mrb[0].mxu0
          %1584 = vmatprep.mubr.bf16.mxu0 %v1357
          %1585 = vmatmul.mubr.bf16.gmra.mrb[0].mxu0 %v1356
          %v1586 = vpop.f32.mrb[0].mxu0
          %v1587 = vadd.f32 0.0, %v1586
          %v1588 = vpop.f32.mrb[0].mxu0
          %v1589 = vpop.f32.mrb[0].mxu0
          %v1590 = vadd.f32 0.0, %v1589
          %v1591 = vpop.f32.mrb[0].mxu0
          %1592 = vmatprep.mubr.bf16.mxu0 %v1359
          %1593 = vmatmul.mubr.bf16.gmra.mrb[0].mxu0 %v1358
          %v1594 = vpop.f32.mrb[0].mxu0
          %v1595 = vadd.f32 0.0, %v1594
          %v1596 = vpop.f32.mrb[0].mxu0
          %v1597 = vpop.f32.mrb[0].mxu0
          %v1598 = vadd.f32 0.0, %v1597
          %v1599 = vpop.f32.mrb[0].mxu0
          %1600 = vmatprep.mubr.bf16.mxu0 %v1361
          %1601 = vmatmul.mubr.bf16.gmra.mrb[0].mxu0 %v1360
          %v1602 = vpop.f32.mrb[0].mxu0
          %v1603 = vadd.f32 0.0, %v1602
          %v1604 = vpop.f32.mrb[0].mxu0
          %v1605 = vpop.f32.mrb[0].mxu0
          %v1606 = vadd.f32 0.0, %v1605
          %v1607 = vpop.f32.mrb[0].mxu0
          %1608 = vmatprep.mubr.bf16.mxu0 %v1363
          %1609 = vmatmul.mubr.bf16.gmra.mrb[0].mxu0 %v1362
          %v1610 = vpop.f32.mrb[0].mxu0
          %v1611 = vadd.f32 0.0, %v1610
          %v1612 = vpop.f32.mrb[0].mxu0
          %v1613 = vpop.f32.mrb[0].mxu0
          %v1614 = vadd.f32 0.0, %v1613
          %v1615 = vpop.f32.mrb[0].mxu0
          %1616 = vmatprep.mubr.bf16.mxu0 %v1365
          %1617 = vmatmul.mubr.bf16.gmra.mrb[0].mxu0 %v1364
          %v1618 = vpop.f32.mrb[0].mxu0
          %v1619 = vadd.f32 0.0, %v1618
          %v1620 = vpop.f32.mrb[0].mxu0
          %v1621 = vpop.f32.mrb[0].mxu0
          %v1622 = vadd.f32 0.0, %v1621
          %v1623 = vpop.f32.mrb[0].mxu0
          %1624 = vmatprep.mubr.bf16.mxu0 %v1367
          %1625 = vmatmul.mubr.bf16.gmra.mrb[0].mxu0 %v1366
          %v1626 = vpop.f32.mrb[0].mxu0
          %v1627 = vadd.f32 0.0, %v1626
          %v1628 = vpop.f32.mrb[0].mxu0
          %v1629 = vpop.f32.mrb[0].mxu0
          %v1630 = vadd.f32 0.0, %v1629
          %v1631 = vpop.f32.mrb[0].mxu0
          %1632 = vmatprep.mubr.bf16.mxu0 %v1369
          %1633 = vmatmul.mubr.bf16.gmra.mrb[0].mxu0 %v1368
          %v1634 = vpop.f32.mrb[0].mxu0
          %v1635 = vadd.f32 0.0, %v1634
          %v1636 = vpop.f32.mrb[0].mxu0
          %v1637 = vpop.f32.mrb[0].mxu0
          %v1638 = vadd.f32 0.0, %v1637
          %v1639 = vpop.f32.mrb[0].mxu0
          %1640 = vmatprep.mubr.bf16.mxu0 %v1371
          %1641 = vmatmul.mubr.bf16.gmra.mrb[0].mxu0 %v1370
          %v1642 = vpop.f32.mrb[0].mxu0
          %v1643 = vadd.f32 0.0, %v1642
          %v1644 = vpop.f32.mrb[0].mxu0
          %v1645 = vpop.f32.mrb[0].mxu0
          %v1646 = vadd.f32 0.0, %v1645
          %v1647 = vpop.f32.mrb[0].mxu0
          %1648 = vmatprep.mubr.bf16.mxu0 %v1373
          %1649 = vmatmul.mubr.bf16.gmra.mrb[0].mxu0 %v1372
          %v1650 = vpop.f32.mrb[0].mxu0
          %v1651 = vadd.f32 0.0, %v1650
          %v1652 = vpop.f32.mrb[0].mxu0
          %v1653 = vpop.f32.mrb[0].mxu0
          %v1654 = vadd.f32 0.0, %v1653
          %v1655 = vpop.f32.mrb[0].mxu0
          %1656 = vmatprep.mubr.bf16.mxu0 %v1375
          %1657 = vmatmul.mubr.bf16.gmra.mrb[0].mxu0 %v1374
          %v1658 = vpop.f32.mrb[0].mxu0
          %v1659 = vadd.f32 0.0, %v1658
          %v1660 = vpop.f32.mrb[0].mxu0
          %v1661 = vpop.f32.mrb[0].mxu0
          %v1662 = vadd.f32 0.0, %v1661
          %v1663 = vpop.f32.mrb[0].mxu0
          %1664 = vdwg.mxu0
          %v1681 = vunpack.c.l.b16 %v752
          %v1682 = vunpack.c.l.b16 %v753
          %v1683 = vunpack.c.l.b16 %v754
          %v1684 = vunpack.c.l.b16 %v755
          %v1685 = vunpack.c.l.b16 %v756
          %v1686 = vunpack.c.l.b16 %v757
          %v1687 = vunpack.c.l.b16 %v758
          %v1688 = vunpack.c.l.b16 %v759
          %v1689 = vunpack.c.l.b16 %v760
          %v1690 = vunpack.c.l.b16 %v761
          %v1691 = vunpack.c.l.b16 %v762
          %v1692 = vunpack.c.l.b16 %v763
          %v1693 = vunpack.c.l.b16 %v764
          %v1694 = vunpack.c.l.b16 %v765
          %v1695 = vunpack.c.l.b16 %v766
          %v1696 = vunpack.c.l.b16 %v767
          %v1697 = vpack.c.b16 %v1682, %v1681
          %v1698 = vpack.c.b16 %v1684, %v1683
          %v1699 = vpack.c.b16 %v1686, %v1685
          %v1700 = vpack.c.b16 %v1688, %v1687
          %v1701 = vpack.c.b16 %v1690, %v1689
          %v1702 = vpack.c.b16 %v1692, %v1691
          %v1703 = vpack.c.b16 %v1694, %v1693
          %v1704 = vpack.c.b16 %v1696, %v1695
          %1713 = vmatprep.subr.bf16.mxu0 0
          %1714 = vmatpush1.bf16.msra.mxu0 %v1697
          %1715 = vmatprep.subr.bf16.mxu0 0
          %1716 = vmatpush1.bf16.msra.mxu0 %v1698
          %1717 = vmatprep.subr.bf16.mxu0 0
          %1718 = vmatpush1.bf16.msra.mxu0 %v1699
          %1719 = vmatprep.subr.bf16.mxu0 0
          %1720 = vmatpush1.bf16.msra.mxu0 %v1700
          %1721 = vmatprep.subr.bf16.mxu0 0
          %1722 = vmatpush1.bf16.msra.mxu0 %v1701
          %1723 = vmatprep.subr.bf16.mxu0 0
          %1724 = vmatpush1.bf16.msra.mxu0 %v1702
          %1725 = vmatprep.subr.bf16.mxu0 0
          %1726 = vmatpush1.bf16.msra.mxu0 %v1703
          %1727 = vmatprep.subr.bf16.mxu0 0
          %1728 = vmatpush1.bf16.msra.mxu0 %v1704
          %1729 = vmatprep.subr.bf16.mxu0 0
          %1730 = vmatpush1.bf16.msra.mxu0 0
          %1731 = vmatprep.subr.bf16.mxu0 0
          %1732 = vmatpush1.bf16.msra.mxu0 0
          %1733 = vmatprep.subr.bf16.mxu0 0
          %1734 = vmatpush1.bf16.msra.mxu0 0
          %1735 = vmatprep.subr.bf16.mxu0 0
          %1736 = vmatpush1.bf16.msra.mxu0 0
          %1737 = vmatprep.subr.bf16.mxu0 0
          %1738 = vmatpush1.bf16.msra.mxu0 0
          %1739 = vmatprep.subr.bf16.mxu0 0
          %1740 = vmatpush1.bf16.msra.mxu0 0
          %1741 = vmatprep.subr.bf16.mxu0 0
          %1742 = vmatpush1.bf16.msra.mxu0 0
          %1743 = vmatprep.subr.bf16.mxu0 0
          %1744 = vmatpush1.bf16.msra.mxu0 0
          %1745 = vmatprep.mubr.bf16.mxu0 0
          %1746 = vmatmul.mubr.bf16.gmra.mrb[0].mxu0 %v736
          %v1747 = vpop.f32.mrb[0].mxu0
          %v1748 = vadd.f32 %v1539, %v1747
          %v1749 = vpop.f32.mrb[0].mxu0
          %v1750 = vpop.f32.mrb[0].mxu0
          %v1751 = vadd.f32 %v1542, %v1750
          %v1752 = vpop.f32.mrb[0].mxu0
          %1753 = vmatprep.mubr.bf16.mxu0 0
          %1754 = vmatmul.mubr.bf16.gmra.mrb[0].mxu0 %v737
          %v1755 = vpop.f32.mrb[0].mxu0
          %v1756 = vadd.f32 %v1547, %v1755
          %v1757 = vpop.f32.mrb[0].mxu0
          %v1758 = vpop.f32.mrb[0].mxu0
          %v1759 = vadd.f32 %v1550, %v1758
          %v1760 = vpop.f32.mrb[0].mxu0
          %1761 = vmatprep.mubr.bf16.mxu0 0
          %1762 = vmatmul.mubr.bf16.gmra.mrb[0].mxu0 %v738
          %v1763 = vpop.f32.mrb[0].mxu0
          %v1764 = vadd.f32 %v1555, %v1763
          %v1765 = vpop.f32.mrb[0].mxu0
          %v1766 = vpop.f32.mrb[0].mxu0
          %v1767 = vadd.f32 %v1558, %v1766
          %v1768 = vpop.f32.mrb[0].mxu0
          %1769 = vmatprep.mubr.bf16.mxu0 0
          %1770 = vmatmul.mubr.bf16.gmra.mrb[0].mxu0 %v739
          %v1771 = vpop.f32.mrb[0].mxu0
          %v1772 = vadd.f32 %v1563, %v1771
          %v1773 = vpop.f32.mrb[0].mxu0
          %v1774 = vpop.f32.mrb[0].mxu0
          %v1775 = vadd.f32 %v1566, %v1774
          %v1776 = vpop.f32.mrb[0].mxu0
          %1777 = vmatprep.mubr.bf16.mxu0 0
          %1778 = vmatmul.mubr.bf16.gmra.mrb[0].mxu0 %v740
          %v1779 = vpop.f32.mrb[0].mxu0
          %v1780 = vadd.f32 %v1571, %v1779
          %v1781 = vpop.f32.mrb[0].mxu0
          %v1782 = vpop.f32.mrb[0].mxu0
          %v1783 = vadd.f32 %v1574, %v1782
          %v1784 = vpop.f32.mrb[0].mxu0
          %1785 = vmatprep.mubr.bf16.mxu0 0
          %1786 = vmatmul.mubr.bf16.gmra.mrb[0].mxu0 %v741
          %v1787 = vpop.f32.mrb[0].mxu0
          %v1788 = vadd.f32 %v1579, %v1787
          %v1789 = vpop.f32.mrb[0].mxu0
          %v1790 = vpop.f32.mrb[0].mxu0
          %v1791 = vadd.f32 %v1582, %v1790
          %v1792 = vpop.f32.mrb[0].mxu0
          %1793 = vmatprep.mubr.bf16.mxu0 0
          %1794 = vmatmul.mubr.bf16.gmra.mrb[0].mxu0 %v742
          %v1795 = vpop.f32.mrb[0].mxu0
          %v1796 = vadd.f32 %v1587, %v1795
          %v1797 = vpop.f32.mrb[0].mxu0
          %v1798 = vpop.f32.mrb[0].mxu0
          %v1799 = vadd.f32 %v1590, %v1798
          %v1800 = vpop.f32.mrb[0].mxu0
          %1801 = vmatprep.mubr.bf16.mxu0 0
          %1802 = vmatmul.mubr.bf16.gmra.mrb[0].mxu0 %v743
          %v1803 = vpop.f32.mrb[0].mxu0
          %v1804 = vadd.f32 %v1595, %v1803
          %v1805 = vpop.f32.mrb[0].mxu0
          %v1806 = vpop.f32.mrb[0].mxu0
          %v1807 = vadd.f32 %v1598, %v1806
          %v1808 = vpop.f32.mrb[0].mxu0
          %1809 = vmatprep.mubr.bf16.mxu0 0
          %1810 = vmatmul.mubr.bf16.gmra.mrb[0].mxu0 %v744
          %v1811 = vpop.f32.mrb[0].mxu0
          %v1812 = vadd.f32 %v1603, %v1811
          %v1813 = vpop.f32.mrb[0].mxu0
          %v1814 = vpop.f32.mrb[0].mxu0
          %v1815 = vadd.f32 %v1606, %v1814
          %v1816 = vpop.f32.mrb[0].mxu0
          %1817 = vmatprep.mubr.bf16.mxu0 0
          %1818 = vmatmul.mubr.bf16.gmra.mrb[0].mxu0 %v745
          %v1819 = vpop.f32.mrb[0].mxu0
          %v1820 = vadd.f32 %v1611, %v1819
          %v1821 = vpop.f32.mrb[0].mxu0
          %v1822 = vpop.f32.mrb[0].mxu0
          %v1823 = vadd.f32 %v1614, %v1822
          %v1824 = vpop.f32.mrb[0].mxu0
          %1825 = vmatprep.mubr.bf16.mxu0 0
          %1826 = vmatmul.mubr.bf16.gmra.mrb[0].mxu0 %v746
          %v1827 = vpop.f32.mrb[0].mxu0
          %v1828 = vadd.f32 %v1619, %v1827
          %v1829 = vpop.f32.mrb[0].mxu0
          %v1830 = vpop.f32.mrb[0].mxu0
          %v1831 = vadd.f32 %v1622, %v1830
          %v1832 = vpop.f32.mrb[0].mxu0
          %1833 = vmatprep.mubr.bf16.mxu0 0
          %1834 = vmatmul.mubr.bf16.gmra.mrb[0].mxu0 %v747
          %v1835 = vpop.f32.mrb[0].mxu0
          %v1836 = vadd.f32 %v1627, %v1835
          %v1837 = vpop.f32.mrb[0].mxu0
          %v1838 = vpop.f32.mrb[0].mxu0
          %v1839 = vadd.f32 %v1630, %v1838
          %v1840 = vpop.f32.mrb[0].mxu0
          %1841 = vmatprep.mubr.bf16.mxu0 0
          %1842 = vmatmul.mubr.bf16.gmra.mrb[0].mxu0 %v748
          %v1843 = vpop.f32.mrb[0].mxu0
          %v1844 = vadd.f32 %v1635, %v1843
          %v1845 = vpop.f32.mrb[0].mxu0
          %v1846 = vpop.f32.mrb[0].mxu0
          %v1847 = vadd.f32 %v1638, %v1846
          %v1848 = vpop.f32.mrb[0].mxu0
          %1849 = vmatprep.mubr.bf16.mxu0 0
          %1850 = vmatmul.mubr.bf16.gmra.mrb[0].mxu0 %v749
          %v1851 = vpop.f32.mrb[0].mxu0
          %v1852 = vadd.f32 %v1643, %v1851
          %v1853 = vpop.f32.mrb[0].mxu0
          %v1854 = vpop.f32.mrb[0].mxu0
          %v1855 = vadd.f32 %v1646, %v1854
          %v1856 = vpop.f32.mrb[0].mxu0
          %1857 = vmatprep.mubr.bf16.mxu0 0
          %1858 = vmatmul.mubr.bf16.gmra.mrb[0].mxu0 %v750
          %v1859 = vpop.f32.mrb[0].mxu0
          %v1860 = vadd.f32 %v1651, %v1859
          %v1861 = vpop.f32.mrb[0].mxu0
          %v1862 = vpop.f32.mrb[0].mxu0
          %v1863 = vadd.f32 %v1654, %v1862
          %v1864 = vpop.f32.mrb[0].mxu0
          %1865 = vmatprep.mubr.bf16.mxu0 0
          %1866 = vmatmul.mubr.bf16.gmra.mrb[0].mxu0 %v751
          %v1867 = vpop.f32.mrb[0].mxu0
          %v1868 = vadd.f32 %v1659, %v1867
          %v1869 = vpop.f32.mrb[0].mxu0
          %v1870 = vpop.f32.mrb[0].mxu0
          %v1871 = vadd.f32 %v1662, %v1870
          %v1872 = vpop.f32.mrb[0].mxu0
          %1873 = vdwg.mxu0
          %v1874 = vsub.f32 0.0, %v1748
          %v1875 = vsub.f32 0.0, %v1751
          %v1876 = vsub.f32 0.0, %v1756
          %v1877 = vsub.f32 0.0, %v1759
          %v1878 = vsub.f32 0.0, %v1764
          %v1879 = vsub.f32 0.0, %v1767
          %v1880 = vsub.f32 0.0, %v1772
          %v1881 = vsub.f32 0.0, %v1775
          %v1882 = vsub.f32 0.0, %v1780
          %v1883 = vsub.f32 0.0, %v1783
          %v1884 = vsub.f32 0.0, %v1788
          %v1885 = vsub.f32 0.0, %v1791
          %v1886 = vsub.f32 0.0, %v1796
          %v1887 = vsub.f32 0.0, %v1799
          %v1888 = vsub.f32 0.0, %v1804
          %v1889 = vsub.f32 0.0, %v1807
          %v1890 = vsub.f32 0.0, %v1812
          %v1891 = vsub.f32 0.0, %v1815
          %v1892 = vsub.f32 0.0, %v1820
          %v1893 = vsub.f32 0.0, %v1823
          %v1894 = vsub.f32 0.0, %v1828
          %v1895 = vsub.f32 0.0, %v1831
          %v1896 = vsub.f32 0.0, %v1836
          %v1897 = vsub.f32 0.0, %v1839
          %v1898 = vsub.f32 0.0, %v1844
          %v1899 = vsub.f32 0.0, %v1847
          %v1900 = vsub.f32 0.0, %v1852
          %v1901 = vsub.f32 0.0, %v1855
          %v1902 = vsub.f32 0.0, %v1860
          %v1903 = vsub.f32 0.0, %v1863
          %v1904 = vsub.f32 0.0, %v1868
          %v1905 = vsub.f32 0.0, %v1871
          %v1906 = vmul.f32 %v1874, 1.442695
          %v1907 = vpow.pop %v1906
          %v1908 = vmul.f32 %v1875, 1.442695
          %v1909 = vpow.pop %v1908
          %v1910 = vmul.f32 %v1876, 1.442695
          %v1911 = vpow.pop %v1910
          %v1912 = vmul.f32 %v1877, 1.442695
          %v1913 = vpow.pop %v1912
          %v1914 = vmul.f32 %v1878, 1.442695
          %v1915 = vpow.pop %v1914
          %v1916 = vmul.f32 %v1879, 1.442695
          %v1917 = vpow.pop %v1916
          %v1918 = vmul.f32 %v1880, 1.442695
          %v1919 = vpow.pop %v1918
          %v1920 = vmul.f32 %v1881, 1.442695
          %v1921 = vpow.pop %v1920
          %v1922 = vmul.f32 %v1882, 1.442695
          %v1923 = vpow.pop %v1922
          %v1924 = vmul.f32 %v1883, 1.442695
          %v1925 = vpow.pop %v1924
          %v1926 = vmul.f32 %v1884, 1.442695
          %v1927 = vpow.pop %v1926
          %v1928 = vmul.f32 %v1885, 1.442695
          %v1929 = vpow.pop %v1928
          %v1930 = vmul.f32 %v1886, 1.442695
          %v1931 = vpow.pop %v1930
          %v1932 = vmul.f32 %v1887, 1.442695
          %v1933 = vpow.pop %v1932
          %v1934 = vmul.f32 %v1888, 1.442695
          %v1935 = vpow.pop %v1934
          %v1936 = vmul.f32 %v1889, 1.442695
          %v1937 = vpow.pop %v1936
          %v1938 = vmul.f32 %v1890, 1.442695
          %v1939 = vpow.pop %v1938
          %v1940 = vmul.f32 %v1891, 1.442695
          %v1941 = vpow.pop %v1940
          %v1942 = vmul.f32 %v1892, 1.442695
          %v1943 = vpow.pop %v1942
          %v1944 = vmul.f32 %v1893, 1.442695
          %v1945 = vpow.pop %v1944
          %v1946 = vmul.f32 %v1894, 1.442695
          %v1947 = vpow.pop %v1946
          %v1948 = vmul.f32 %v1895, 1.442695
          %v1949 = vpow.pop %v1948
          %v1950 = vmul.f32 %v1896, 1.442695
          %v1951 = vpow.pop %v1950
          %v1952 = vmul.f32 %v1897, 1.442695
          %v1953 = vpow.pop %v1952
          %v1954 = vmul.f32 %v1898, 1.442695
          %v1955 = vpow.pop %v1954
          %v1956 = vmul.f32 %v1899, 1.442695
          %v1957 = vpow.pop %v1956
          %v1958 = vmul.f32 %v1900, 1.442695
          %v1959 = vpow.pop %v1958
          %v1960 = vmul.f32 %v1901, 1.442695
          %v1961 = vpow.pop %v1960
          %v1962 = vmul.f32 %v1902, 1.442695
          %v1963 = vpow.pop %v1962
          %v1964 = vmul.f32 %v1903, 1.442695
          %v1965 = vpow.pop %v1964
          %v1966 = vmul.f32 %v1904, 1.442695
          %v1967 = vpow.pop %v1966
          %v1968 = vmul.f32 %v1905, 1.442695
          %v1969 = vpow.pop %v1968
          %v1970 = vadd.f32 %v1907, 1.0
          %v1971 = vadd.f32 %v1909, 1.0
          %v1972 = vadd.f32 %v1911, 1.0
          %v1973 = vadd.f32 %v1913, 1.0
          %v1974 = vadd.f32 %v1915, 1.0
          %v1975 = vadd.f32 %v1917, 1.0
          %v1976 = vadd.f32 %v1919, 1.0
          %v1977 = vadd.f32 %v1921, 1.0
          %v1978 = vadd.f32 %v1923, 1.0
          %v1979 = vadd.f32 %v1925, 1.0
          %v1980 = vadd.f32 %v1927, 1.0
          %v1981 = vadd.f32 %v1929, 1.0
          %v1982 = vadd.f32 %v1931, 1.0
          %v1983 = vadd.f32 %v1933, 1.0
          %v1984 = vadd.f32 %v1935, 1.0
          %v1985 = vadd.f32 %v1937, 1.0
          %v1986 = vadd.f32 %v1939, 1.0
          %v1987 = vadd.f32 %v1941, 1.0
          %v1988 = vadd.f32 %v1943, 1.0
          %v1989 = vadd.f32 %v1945, 1.0
          %v1990 = vadd.f32 %v1947, 1.0
          %v1991 = vadd.f32 %v1949, 1.0
          %v1992 = vadd.f32 %v1951, 1.0
          %v1993 = vadd.f32 %v1953, 1.0
          %v1994 = vadd.f32 %v1955, 1.0
          %v1995 = vadd.f32 %v1957, 1.0
          %v1996 = vadd.f32 %v1959, 1.0
          %v1997 = vadd.f32 %v1961, 1.0
          %v1998 = vadd.f32 %v1963, 1.0
          %v1999 = vadd.f32 %v1965, 1.0
          %v2000 = vadd.f32 %v1967, 1.0
          %v2001 = vadd.f32 %v1969, 1.0
          %v2002 = vrcp.pop %v1970
          %v2003 = vrcp.pop %v1971
          %v2004 = vrcp.pop %v1972
          %v2005 = vrcp.pop %v1973
          %v2006 = vrcp.pop %v1974
          %v2007 = vrcp.pop %v1975
          %v2008 = vrcp.pop %v1976
          %v2009 = vrcp.pop %v1977
          %v2010 = vrcp.pop %v1978
          %v2011 = vrcp.pop %v1979
          %v2012 = vrcp.pop %v1980
          %v2013 = vrcp.pop %v1981
          %v2014 = vrcp.pop %v1982
          %v2015 = vrcp.pop %v1983
          %v2016 = vrcp.pop %v1984
          %v2017 = vrcp.pop %v1985
          %v2018 = vrcp.pop %v1986
          %v2019 = vrcp.pop %v1987
          %v2020 = vrcp.pop %v1988
          %v2021 = vrcp.pop %v1989
          %v2022 = vrcp.pop %v1990
          %v2023 = vrcp.pop %v1991
          %v2024 = vrcp.pop %v1992
          %v2025 = vrcp.pop %v1993
          %v2026 = vrcp.pop %v1994
          %v2027 = vrcp.pop %v1995
          %v2028 = vrcp.pop %v1996
          %v2029 = vrcp.pop %v1997
          %v2030 = vrcp.pop %v1998
          %v2031 = vrcp.pop %v1999
          %v2032 = vrcp.pop %v2000
          %v2033 = vrcp.pop %v2001
          %v2034 = vmul.f32 %v1748, %v2002
          %v2035 = vmul.f32 %v1751, %v2003
          %v2036 = vmul.f32 %v1756, %v2004
          %v2037 = vmul.f32 %v1759, %v2005
          %v2038 = vmul.f32 %v1764, %v2006
          %v2039 = vmul.f32 %v1767, %v2007
          %v2040 = vmul.f32 %v1772, %v2008
          %v2041 = vmul.f32 %v1775, %v2009
          %v2042 = vmul.f32 %v1780, %v2010
          %v2043 = vmul.f32 %v1783, %v2011
          %v2044 = vmul.f32 %v1788, %v2012
          %v2045 = vmul.f32 %v1791, %v2013
          %v2046 = vmul.f32 %v1796, %v2014
          %v2047 = vmul.f32 %v1799, %v2015
          %v2048 = vmul.f32 %v1804, %v2016
          %v2049 = vmul.f32 %v1807, %v2017
          %v2050 = vmul.f32 %v1812, %v2018
          %v2051 = vmul.f32 %v1815, %v2019
          %v2052 = vmul.f32 %v1820, %v2020
          %v2053 = vmul.f32 %v1823, %v2021
          %v2054 = vmul.f32 %v1828, %v2022
          %v2055 = vmul.f32 %v1831, %v2023
          %v2056 = vmul.f32 %v1836, %v2024
          %v2057 = vmul.f32 %v1839, %v2025
          %v2058 = vmul.f32 %v1844, %v2026
          %v2059 = vmul.f32 %v1847, %v2027
          %v2060 = vmul.f32 %v1852, %v2028
          %v2061 = vmul.f32 %v1855, %v2029
          %v2062 = vmul.f32 %v1860, %v2030
          %v2063 = vmul.f32 %v1863, %v2031
          %v2064 = vmul.f32 %v1868, %v2032
          %v2065 = vmul.f32 %v1871, %v2033
          %s2066 = scalar_lea.vmem %s191, %s209 [#allocation2]
          %2067 = vst [vmem:[%s2066] sm:$0xff] %v2034
          %2068 = vst [vmem:[%s2066 + $0x8] sm:$0xff] %v2035
          %2069 = vst [vmem:[%s2066 + $0x10] sm:$0xff] %v2036
          %2070 = vst [vmem:[%s2066 + $0x18] sm:$0xff] %v2037
          %2071 = vst [vmem:[%s2066 + $0x20] sm:$0xff] %v2038
          %2072 = vst [vmem:[%s2066 + $0x28] sm:$0xff] %v2039
          %2073 = vst [vmem:[%s2066 + $0x30] sm:$0xff] %v2040
          %2074 = vst [vmem:[%s2066 + $0x38] sm:$0xff] %v2041
          %2075 = vst [vmem:[%s2066 + $0x40] sm:$0xff] %v2042
          %2076 = vst [vmem:[%s2066 + $0x48] sm:$0xff] %v2043
          %2077 = vst [vmem:[%s2066 + $0x50] sm:$0xff] %v2044
          %2078 = vst [vmem:[%s2066 + $0x58] sm:$0xff] %v2045
          %2079 = vst [vmem:[%s2066 + $0x60] sm:$0xff] %v2046
          %2080 = vst [vmem:[%s2066 + $0x68] sm:$0xff] %v2047
          %2081 = vst [vmem:[%s2066 + $0x70] sm:$0xff] %v2048
          %2082 = vst [vmem:[%s2066 + $0x78] sm:$0xff] %v2049
          %2083 = vst [vmem:[%s2066 + $0x80] sm:$0xff] %v2050
          %2084 = vst [vmem:[%s2066 + $0x88] sm:$0xff] %v2051
          %2085 = vst [vmem:[%s2066 + $0x90] sm:$0xff] %v2052
          %2086 = vst [vmem:[%s2066 + $0x98] sm:$0xff] %v2053
          %2087 = vst [vmem:[%s2066 + $0xa0] sm:$0xff] %v2054
          %2088 = vst [vmem:[%s2066 + $0xa8] sm:$0xff] %v2055
          %2089 = vst [vmem:[%s2066 + $0xb0] sm:$0xff] %v2056
          %2090 = vst [vmem:[%s2066 + $0xb8] sm:$0xff] %v2057
          %2091 = vst [vmem:[%s2066 + $0xc0] sm:$0xff] %v2058
          %2092 = vst [vmem:[%s2066 + $0xc8] sm:$0xff] %v2059
          %2093 = vst [vmem:[%s2066 + $0xd0] sm:$0xff] %v2060
          %2094 = vst [vmem:[%s2066 + $0xd8] sm:$0xff] %v2061
          %2095 = vst [vmem:[%s2066 + $0xe0] sm:$0xff] %v2062
          %2096 = vst [vmem:[%s2066 + $0xe8] sm:$0xff] %v2063
          %2097 = vst [vmem:[%s2066 + $0xf0] sm:$0xff] %v2064
          %2098 = vst [vmem:[%s2066 + $0xf8] sm:$0xff] %v2065
        $region41: #{embedding_block_forward.1} parent=35 // loop_footer
          %s208 = sadd.s32 1, %s204
        $region42: #{embedding_block_forward.1} parent=35 // loop_footer_branch
          %203 = sbr.rel target = $region38
        $region43: #{embedding_block_forward.1} parent=35 // loop_exit
          _
        %s2099 = sand.u32 %s115, 1
        %s2100 = scalar_lea.sflag [#allocation3], %s2099
        %s2101 = sand.u32 %s115, 1
        %s2102 = smul.addr %s2101, 1024
        %s2103 = scalar_lea.vmem [#allocation2], %s2102
        // Predicated region
        $region44: #{embedding_block_forward.1} parent=35 // pred_check
          %p2104 = pneg %p125
        $region45: #{embedding_block_forward.1} parent=35 // pred_check_branch
          %2106 = sbr.rel (%p2104) target = $region47
        $region46: #{embedding_block_forward.1} parent=35 // pred_region
          %s2107 = smul.u32 128, %s18
          %s2109 = ssub.s32 16384, 16384
          %2110 = vsyncadd %s2100, %s2109
          %s2111 = smul.addr %s2107, 128
          %s2112 = scalar_lea.hbm %s4, %s2111
          %s2113 = sshll.u32 %s2103, 4
          %s2114 = int_to_ptr.vmem [resolvable:$true] %s2113
          %2119 = dma.vmem_to_hbm [thread:$0]  %s2114, 16384, %s2112, %s2100, 128, 128, 8
        $region47: #{embedding_block_forward.1} parent=35 // pred_fallthru
          _
      $region36: #{embedding_block_forward.1} parent=5 // pred_fallthru
        _
      %p2120 = scmp.le.s32.totalorder 2, %s13
      // Predicated region
      $region48: #{embedding_block_forward.1} parent=5 // pred_check
        %p2121 = pneg %p2120
      $region49: #{embedding_block_forward.1} parent=5 // pred_check_branch
        %2123 = sbr.rel (%p2121) target = $region51
      $region50: #{embedding_block_forward.1} parent=5 // pred_region
        %s2124 = ssub.s32 %s13, 2
        // Predicated region
        $region52: #{embedding_block_forward.1} parent=50 // pred_check
          %p2125 = pneg %p131
        $region53: #{embedding_block_forward.1} parent=50 // pred_check_branch
          %2127 = sbr.rel (%p2125) target = $region55
        $region54: #{embedding_block_forward.1} parent=50 // pred_region
          %s2128 = sand.u32 %s116, 1
          %s2129 = scalar_lea.sflag [#allocation3], %s2128
          %s2130 = sand.u32 %s116, 1
          %s2131 = smul.addr %s2130, 1024
          %s2132 = scalar_lea.vmem [#allocation2], %s2131
          %2133 = dma.done %s2129, 16384
        $region55: #{embedding_block_forward.1} parent=50 // pred_fallthru
          _
      $region51: #{embedding_block_forward.1} parent=5 // pred_fallthru
        _
    $region6: #{embedding_block_forward.1} parent=1 // loop_footer
      %s17 = sadd.s32 1, %s13
    $region7: #{embedding_block_forward.1} parent=1 // loop_footer_branch
      %12 = sbr.rel target = $region3
    $region8: #{embedding_block_forward.1} parent=1 // loop_exit
      _
    %2134 = vsyncpa [#allocation3], 1
    %s2135 = scalar_lea.sflag [#allocation3], 1
    %2136 = vsyncpa %s2135, 1

</llo_original>
